<compile_context>
chip_gen: v7x
topology: tpu7x:2x2x1
jax: 0.10.0
libtpu: 0.0.40
codegen_flags: <defaults>
</compile_context>

<pallas_src>
import functools

import jax
import jax.numpy as jnp
from jax.experimental import pallas as pl
from jax.experimental.pallas import tpu as pltpu

_L = 250    # logical signal length (hard-coded by the module)
_LP = 256   # lane-padded length (multiple of 128 -> unmasked vector stores)


def _sigmoid(v):
    # exp on the EUP + exact reciprocal (no multi-op VPU divide sequence).
    return pl.reciprocal(1.0 + jnp.exp(-v), approx=False)


# ---------------------------------------------------------------------------
# Kernel (one batch tile per grid step)
# ---------------------------------------------------------------------------
def _gru_simp_kernel(enc_p_ref,      # SMEM (32,) f32  packed encoder GRU scalars
                     dec_p_ref,      # SMEM (20,) f32  packed decoder GRU scalars
                     x_ref,          # VMEM (TM, 256)  f32   batch tile of inputs
                     w1g_ref,        # VMEM (4, 256, 512) bf16  fc1 W^T regrouped by hidden k
                     b1_ref,         # VMEM (1, 512)   f32
                     w2t_ref,        # VMEM (512, 256) bf16  fc2 W^T (lane-padded)
                     b2_ref,         # VMEM (1, 256)   f32
                     out_ref):       # VMEM (TM, 256)  f32
    f32 = jnp.float32
    x = x_ref[...]                                           # (TM, 256)

    # ---- Encg.rnn1: GRU(input=1, hidden=4), single step, h0 == 0 (torch default).
    # W_hh @ h0 == 0 exactly, so only the hh biases survive (b_r/b_z hold the
    # combined b_ih + b_hh; b_hn stays separate because it sits inside r * (...)).
    # enc_p layout: [0:12] w_ir,w_iz,w_in | [12:16] b_r | [16:20] b_z
    #               [20:24] b_in | [24:28] b_hn
    h_enc = []
    for k in range(4):                                       # static unroll over hidden
        r = _sigmoid(enc_p_ref[k] * x + enc_p_ref[12 + k])
        z = _sigmoid(enc_p_ref[4 + k] * x + enc_p_ref[16 + k])
        n = jnp.tanh(enc_p_ref[8 + k] * x + enc_p_ref[20 + k] + r * enc_p_ref[24 + k])
        h_enc.append((1.0 - z) * n)                          # (TM, 256) f32

    # ---- Encg.fc1 / fc2: hn = fc2(relu(fc1(h_n.reshape(1, 1000)))).
    # stacked[m, 4*b + k] == h_enc[k][m, b]; w1g[k] holds the matching rows of
    # fc1.W^T, so the (.,1000)@(1000,512) matmul becomes four lane-dense
    # (TM,256)@(256,512) MXU matmuls with f32 accumulation (bf16 weights).
    # Two accumulators break the 4-deep serial add chain on the MXU result pops.
    h_bf = [h.astype(jnp.bfloat16) for h in h_enc]           # one cast per feature
    acc0 = jnp.dot(h_bf[0], w1g_ref[0], preferred_element_type=f32)
    acc1 = jnp.dot(h_bf[1], w1g_ref[1], preferred_element_type=f32)
    acc0 = acc0 + jnp.dot(h_bf[2], w1g_ref[2], preferred_element_type=f32)
    acc1 = acc1 + jnp.dot(h_bf[3], w1g_ref[3], preferred_element_type=f32)
    hid = jnp.maximum(acc0 + acc1 + b1_ref[...], 0.0)        # (TM, 512) f32

    h0 = jnp.dot(hid.astype(jnp.bfloat16), w2t_ref[...],
                 preferred_element_type=f32) + b2_ref[...]   # (TM, 256) == hn

    # ---- Decg.rnn1: GRU(input=4, hidden=1), single step, input = y[0], h0 = hn.
    # dec_p layout: [0:12] W_ih rows (r,z,n; 4 feats each) | [12:15] w_hr,w_hz,w_hn
    #               [15] b_r (=b_ir+b_hr) | [16] b_z | [17] b_in | [18] b_hn
    def ih_dot(base):                                        # sum_f W_ih[g,f] * y[..,f]
        s = dec_p_ref[base] * h_enc[0]
        for f in range(1, 4):
            s = s + dec_p_ref[base + f] * h_enc[f]
        return s

    rd = _sigmoid(ih_dot(0) + dec_p_ref[15] + dec_p_ref[12] * h0)
    zd = _sigmoid(ih_dot(4) + dec_p_ref[16] + dec_p_ref[13] * h0)
    nd = jnp.tanh(ih_dot(8) + dec_p_ref[17] + rd * (dec_p_ref[14] * h0 + dec_p_ref[18]))
    out_ref[...] = (1.0 - zd) * nd + zd * h0                 # yrec (TM, 256)


# ---------------------------------------------------------------------------
# Host-side parameter prep — done ONCE per parameter set (hoisted out of the
# per-call path, per perf feedback).
# ---------------------------------------------------------------------------
def prepare_params(p):
    f32, bf16 = jnp.float32, jnp.bfloat16

    # Encoder GRU(1 -> 4) scalars (gate order r, z, n).
    w_ih = p['enc_w_ih'].reshape(12).astype(f32)
    b_ih = p['enc_b_ih'].astype(f32)
    b_hh = p['enc_b_hh'].astype(f32)
    enc_p = jnp.concatenate([
        w_ih[0:4], w_ih[4:8], w_ih[8:12],        # [0:12]  w_ir, w_iz, w_in
        b_ih[0:4] + b_hh[0:4],                   # [12:16] b_r
        b_ih[4:8] + b_hh[4:8],                   # [16:20] b_z
        b_ih[8:12],                              # [20:24] b_in
        b_hh[8:12],                              # [24:28] b_hn
        jnp.zeros((4,), f32),                    # pad to 32
    ])

    # fc1: stacked index i = 4*b + k -> regroup W^T rows as (k, b, out); pad the
    # 250 "b" axis to 256 with zero rows (they contribute exactly nothing).
    w1g = p['fc1_w'].T.reshape(_L, 4, 512).transpose(1, 0, 2)
    w1g = jnp.pad(w1g, ((0, 0), (0, _LP - _L), (0, 0))).astype(bf16)   # (4,256,512)
    b1 = p['fc1_b'].reshape(1, 512).astype(f32)

    # fc2: transposed, output lanes padded to 256 with zero columns.
    w2t = jnp.pad(p['fc2_w'].T, ((0, 0), (0, _LP - _L))).astype(bf16)  # (512,256)
    b2 = jnp.pad(p['fc2_b'], (0, _LP - _L)).reshape(1, _LP).astype(f32)

    # Decoder GRU(4 -> 1): 19 scalars packed for SMEM (padded to 20).
    dec_p = jnp.concatenate([
        p['dec_w_ih'].reshape(-1),                       # [0:12]  w_ir(4), w_iz(4), w_in(4)
        p['dec_w_hh'].reshape(-1),                       # [12:15] w_hr, w_hz, w_hn
        p['dec_b_ih'][0:2] + p['dec_b_hh'][0:2],         # [15:17] b_r, b_z (combined)
        p['dec_b_ih'][2:3],                              # [17]    b_in
        p['dec_b_hh'][2:3],                              # [18]    b_hn
        jnp.zeros((1,), f32),                            # pad to 20
    ]).astype(f32)

    return {'enc_p': enc_p, 'dec_p': dec_p, 'w1g': w1g, 'b1': b1, 'w2t': w2t, 'b2': b2}


# ---------------------------------------------------------------------------
# Wrappers
# ---------------------------------------------------------------------------
def _round_up(n, m):
    return ((n + m - 1) // m) * m


@functools.partial(jax.jit, static_argnames=('block_m',))
def gru_simp_forward_batched(xb, prepped, *, block_m=None):
    """Apply gru_simp.forward independently to each row of xb: (B, 250) -> (B, 250).

    Weights stay VMEM-resident across the batch grid (constant index_maps) and
    the batch axis is "parallel" so v7x uses both TensorCores.
    """
    B = xb.shape[0]
    if block_m is None:
        block_m = min(256, _round_up(B, 8))   # multiples of 256 fill the v6e/v7x MXU
    block_m = max(8, _round_up(block_m, 8))
    b_pad = _round_up(B, block_m)

    x = jnp.zeros((b_pad, _LP), jnp.float32).at[:B, :_L].set(xb.astype(jnp.float32))

    smem = pl.BlockSpec(memory_space=pltpu.MemorySpace.SMEM)
    in_specs = [
        smem,                                                   # enc_p
        smem,                                                   # dec_p
        pl.BlockSpec((block_m, _LP), lambda i: (i, 0)),         # x   (batch tile)
        pl.BlockSpec((4, _LP, 512), lambda i: (0, 0, 0)),       # w1g (VMEM-resident)
        pl.BlockSpec((1, 512), lambda i: (0, 0)),               # b1
        pl.BlockSpec((512, _LP), lambda i: (0, 0)),             # w2t (VMEM-resident)
        pl.BlockSpec((1, _LP), lambda i: (0, 0)),               # b2
    ]
    out_spec = pl.BlockSpec((block_m, _LP), lambda i: (i, 0))

    yrec = pl.pallas_call(
        _gru_simp_kernel,
        out_shape=jax.ShapeDtypeStruct((b_pad, _LP), jnp.float32),
        grid=(b_pad // block_m,),
        in_specs=in_specs,
        out_specs=out_spec,
        compiler_params=pltpu.CompilerParams(dimension_semantics=("parallel",)),
    )(prepped['enc_p'], prepped['dec_p'], x,
      prepped['w1g'], prepped['b1'], prepped['w2t'], prepped['b2'])
    return yrec[:B, :_L]


def gru_simp_forward(x, prepped):
    """Exact module semantics: x has 250 elements; returns (250, 1)."""
    return gru_simp_forward_batched(x.reshape(1, _L), prepped).reshape(_L, 1)


# ---------------------------------------------------------------------------
# Parameters + pure-JAX reference
# ---------------------------------------------------------------------------
def make_params(key):
    """Deterministic synthetic parameters with the PyTorch module's shapes/init."""
    def unif(k, shape, bound):
        return jax.random.uniform(k, shape, jnp.float32, minval=-bound, maxval=bound)

    ks = jax.random.split(key, 12)
    b_enc = 1.0 / (4 ** 0.5)      # GRU init bound: 1/sqrt(hidden_size)
    b_dec = 1.0                   # decoder hidden_size == 1
    b_fc1 = 1.0 / (1000 ** 0.5)   # Linear init bound: 1/sqrt(in_features)
    b_fc2 = 1.0 / (512 ** 0.5)
    return {
        'enc_w_ih': unif(ks[0], (12, 1), b_enc),
        'enc_w_hh': unif(ks[1], (12, 4), b_enc),   # kernel skips it (h0 == 0); reference uses it
        'enc_b_ih': unif(ks[2], (12,), b_enc),
        'enc_b_hh': unif(ks[3], (12,), b_enc),
        'fc1_w': unif(ks[4], (512, 1000), b_fc1),
        'fc1_b': unif(ks[5], (512,), b_fc1),
        'fc2_w': unif(ks[6], (250, 512), b_fc2),
        'fc2_b': unif(ks[7], (250,), b_fc2),
        'dec_w_ih': unif(ks[8], (3, 4), b_dec),
        'dec_w_hh': unif(ks[9], (3, 1), b_dec),
        'dec_b_ih': unif(ks[10], (3,), b_dec),
        'dec_b_hh': unif(ks[11], (3,), b_dec),
    }


def reference_forward(x, p, matmul_dtype=jnp.float32):
    """Pure-JAX mirror of gru_simp.forward (PyTorch GRU gate order r, z, n).

    Evaluates the full GRU math (including W_hh @ h0, which is exactly zero for
    the encoder).  matmul_dtype=bf16 reproduces the kernel's weight rounding;
    matmul_dtype=f32 is the full-precision PyTorch-equivalent result.
    """
    hi = jax.lax.Precision.HIGHEST
    f32 = jnp.float32

    def gru_cell(x_t, h, w_ih, w_hh, b_ih, b_hh, hidden):
        gi = jnp.dot(x_t, w_ih.T, precision=hi) + b_ih
        gh = jnp.dot(h, w_hh.T, precision=hi) + b_hh
        r = 1.0 / (1.0 + jnp.exp(-(gi[..., :hidden] + gh[..., :hidden])))
        z = 1.0 / (1.0 + jnp.exp(-(gi[..., hidden:2 * hidden] + gh[..., hidden:2 * hidden])))
        n = jnp.tanh(gi[..., 2 * hidden:] + r * gh[..., 2 * hidden:])
        return (1.0 - z) * n + z * h

    xs = x.reshape(-1, 250, 1).astype(f32)                    # (seq=1, 250, 1)

    # --- Encg ---
    h = jnp.zeros((250, 4), f32)
    ys = []
    for t in range(xs.shape[0]):
        h = gru_cell(xs[t], h, p['enc_w_ih'], p['enc_w_hh'],
                     p['enc_b_ih'], p['enc_b_hh'], 4)
        ys.append(h)
    y = jnp.stack(ys, axis=0)                                 # (seq, 250, 4)
    stacked = h.reshape(1, 1000)
    hid = jnp.maximum(
        jnp.dot(stacked.astype(matmul_dtype), p['fc1_w'].T.astype(matmul_dtype),
                precision=hi, preferred_element_type=f32) + p['fc1_b'], 0.0)
    hn = jnp.dot(hid.astype(matmul_dtype), p['fc2_w'].T.astype(matmul_dtype),
                 precision=hi, preferred_element_type=f32) + p['fc2_b']   # (1, 250)

    # --- Decg ---
    hd = hn.reshape(250, 1)
    yrs = []
    for t in range(y.shape[0]):
        hd = gru_cell(y[t], hd, p['dec_w_ih'], p['dec_w_hh'],
                      p['dec_b_ih'], p['dec_b_hh'], 1)
        yrs.append(hd)
    yrec = jnp.stack(yrs, axis=0)                             # (seq, 250, 1)
    return yrec.reshape(250, 1)


if __name__ == "__main__":
    key = jax.random.PRNGKey(0)
    kx, kp, kb = jax.random.split(key, 3)
    params = make_params(kp)
    prepped = prepare_params(params)        # hoisted: done once per parameter set

    # --- single-sample path: exactly the module's forward (x = 250 scalars) ---
    x = jax.random.normal(kx, (250, 1), jnp.float32)
    out = jax.block_until_ready(gru_simp_forward(x, prepped))
    assert out.shape == (250, 1)

    ref_bf16 = reference_forward(x, params, matmul_dtype=jnp.bfloat16)
    ref_f32 = reference_forward(x, params, matmul_dtype=jnp.float32)
    err_bf16 = float(jnp.max(jnp.abs(out - ref_bf16)))
    err_f32 = float(jnp.max(jnp.abs(out - ref_f32)))
    assert err_bf16 < 1e-3, f"kernel vs bf16-matched reference: max abs err {err_bf16}"
    assert err_f32 < 3e-2, f"kernel vs full-f32 reference: max abs err {err_f32}"

    # --- batched path: module applied independently per row; exercises the
    #     4-step batch grid with VMEM-resident weights and parallel semantics ---
    B = 32
    xb = jax.random.normal(kb, (B, 250), jnp.float32)
    outb = jax.block_until_ready(gru_simp_forward_batched(xb, prepped, block_m=8))
    refb = jax.vmap(lambda s: reference_forward(s, params, matmul_dtype=jnp.bfloat16))(xb)
    errb = float(jnp.max(jnp.abs(outb - refb.reshape(B, 250))))
    assert outb.shape == (B, 250)
    assert errb < 1e-3, f"batched kernel vs reference: max abs err {errb}"

    print("KERNEL_OK")
</pallas_src>

<mosaic_0001>
module attributes {stable_mosaic.version = 11 : i64} {
  func.func @_gru_simp_kernel(%arg0: i32, %arg1: memref<32xf32, #tpu.memory_space<smem>>, %arg2: memref<20xf32, #tpu.memory_space<smem>>, %arg3: memref<8x256xf32, #tpu.memory_space<vmem>>, %arg4: memref<4x256x512xbf16, #tpu.memory_space<vmem>>, %arg5: memref<1x512xf32, #tpu.memory_space<vmem>>, %arg6: memref<512x256xbf16, #tpu.memory_space<vmem>>, %arg7: memref<1x256xf32, #tpu.memory_space<vmem>>, %arg8: memref<8x256xf32, #tpu.memory_space<vmem>>) attributes {dimension_semantics = [#tpu.dimension_semantics<parallel>], iteration_bounds = array<i64: 1>, scalar_prefetch = 0 : i64, scratch_operands = 0 : i64, tpu.core_type = #tpu.core_type<tc>, window_params = [{transform_indices = @transform_0, window_bounds = array<i64: 32>}, {transform_indices = @transform_1, window_bounds = array<i64: 20>}, {transform_indices = @transform_2, window_bounds = array<i64: 8, 256>}, {pipeline_mode = #tpu.pipeline_mode<synchronous>, transform_indices = @transform_3, window_bounds = array<i64: 4, 256, 512>}, {pipeline_mode = #tpu.pipeline_mode<synchronous>, transform_indices = @transform_4, window_bounds = array<i64: 1, 512>}, {pipeline_mode = #tpu.pipeline_mode<synchronous>, transform_indices = @transform_5, window_bounds = array<i64: 512, 256>}, {pipeline_mode = #tpu.pipeline_mode<synchronous>, transform_indices = @transform_6, window_bounds = array<i64: 1, 256>}, {transform_indices = @transform_7, window_bounds = array<i64: 8, 256>}]} {
    %c0 = arith.constant 0 : index
    %c0_0 = arith.constant 0 : index
    %0 = vector.load %arg3[%c0, %c0_0] : memref<8x256xf32, #tpu.memory_space<vmem>>, vector<8x256xf32>
    %c0_1 = arith.constant 0 : index
    %1 = memref.load %arg1[%c0_1] : memref<32xf32, #tpu.memory_space<smem>>
    %2 = vector.broadcast %1 : f32 to vector<8x256xf32>
    %3 = arith.mulf %2, %0 : vector<8x256xf32>
    %c12 = arith.constant 12 : index
    %4 = memref.load %arg1[%c12] : memref<32xf32, #tpu.memory_space<smem>>
    %5 = vector.broadcast %4 : f32 to vector<8x256xf32>
    %6 = arith.addf %3, %5 : vector<8x256xf32>
    %cst = arith.constant 0.000000e+00 : f32
    %7 = vector.broadcast %cst : f32 to vector<8x256xf32>
    %8 = arith.subf %7, %6 : vector<8x256xf32>
    %9 = math.exp %8 : vector<8x256xf32>
    %cst_2 = arith.constant 1.000000e+00 : f32
    %10 = vector.broadcast %cst_2 : f32 to vector<8x256xf32>
    %11 = arith.addf %10, %9 : vector<8x256xf32>
    %12 = tpu.reciprocal %11 : vector<8x256xf32> -> vector<8x256xf32>
    %c4 = arith.constant 4 : index
    %13 = memref.load %arg1[%c4] : memref<32xf32, #tpu.memory_space<smem>>
    %14 = vector.broadcast %13 : f32 to vector<8x256xf32>
    %15 = arith.mulf %14, %0 : vector<8x256xf32>
    %c16 = arith.constant 16 : index
    %16 = memref.load %arg1[%c16] : memref<32xf32, #tpu.memory_space<smem>>
    %17 = vector.broadcast %16 : f32 to vector<8x256xf32>
    %18 = arith.addf %15, %17 : vector<8x256xf32>
    %cst_3 = arith.constant 0.000000e+00 : f32
    %19 = vector.broadcast %cst_3 : f32 to vector<8x256xf32>
    %20 = arith.subf %19, %18 : vector<8x256xf32>
    %21 = math.exp %20 : vector<8x256xf32>
    %cst_4 = arith.constant 1.000000e+00 : f32
    %22 = vector.broadcast %cst_4 : f32 to vector<8x256xf32>
    %23 = arith.addf %22, %21 : vector<8x256xf32>
    %24 = tpu.reciprocal %23 : vector<8x256xf32> -> vector<8x256xf32>
    %c8 = arith.constant 8 : index
    %25 = memref.load %arg1[%c8] : memref<32xf32, #tpu.memory_space<smem>>
    %26 = vector.broadcast %25 : f32 to vector<8x256xf32>
    %27 = arith.mulf %26, %0 : vector<8x256xf32>
    %c20 = arith.constant 20 : index
    %28 = memref.load %arg1[%c20] : memref<32xf32, #tpu.memory_space<smem>>
    %29 = vector.broadcast %28 : f32 to vector<8x256xf32>
    %30 = arith.addf %27, %29 : vector<8x256xf32>
    %c24 = arith.constant 24 : index
    %31 = memref.load %arg1[%c24] : memref<32xf32, #tpu.memory_space<smem>>
    %32 = vector.broadcast %31 : f32 to vector<8x256xf32>
    %33 = arith.mulf %12, %32 : vector<8x256xf32>
    %34 = arith.addf %30, %33 : vector<8x256xf32>
    %35 = math.tanh %34 : vector<8x256xf32>
    %cst_5 = arith.constant 1.000000e+00 : f32
    %36 = vector.broadcast %cst_5 : f32 to vector<8x256xf32>
    %37 = arith.subf %36, %24 : vector<8x256xf32>
    %38 = arith.mulf %37, %35 : vector<8x256xf32>
    %c1 = arith.constant 1 : index
    %39 = memref.load %arg1[%c1] : memref<32xf32, #tpu.memory_space<smem>>
    %40 = vector.broadcast %39 : f32 to vector<8x256xf32>
    %41 = arith.mulf %40, %0 : vector<8x256xf32>
    %c13 = arith.constant 13 : index
    %42 = memref.load %arg1[%c13] : memref<32xf32, #tpu.memory_space<smem>>
    %43 = vector.broadcast %42 : f32 to vector<8x256xf32>
    %44 = arith.addf %41, %43 : vector<8x256xf32>
    %cst_6 = arith.constant 0.000000e+00 : f32
    %45 = vector.broadcast %cst_6 : f32 to vector<8x256xf32>
    %46 = arith.subf %45, %44 : vector<8x256xf32>
    %47 = math.exp %46 : vector<8x256xf32>
    %cst_7 = arith.constant 1.000000e+00 : f32
    %48 = vector.broadcast %cst_7 : f32 to vector<8x256xf32>
    %49 = arith.addf %48, %47 : vector<8x256xf32>
    %50 = tpu.reciprocal %49 : vector<8x256xf32> -> vector<8x256xf32>
    %c5 = arith.constant 5 : index
    %51 = memref.load %arg1[%c5] : memref<32xf32, #tpu.memory_space<smem>>
    %52 = vector.broadcast %51 : f32 to vector<8x256xf32>
    %53 = arith.mulf %52, %0 : vector<8x256xf32>
    %c17 = arith.constant 17 : index
    %54 = memref.load %arg1[%c17] : memref<32xf32, #tpu.memory_space<smem>>
    %55 = vector.broadcast %54 : f32 to vector<8x256xf32>
    %56 = arith.addf %53, %55 : vector<8x256xf32>
    %cst_8 = arith.constant 0.000000e+00 : f32
    %57 = vector.broadcast %cst_8 : f32 to vector<8x256xf32>
    %58 = arith.subf %57, %56 : vector<8x256xf32>
    %59 = math.exp %58 : vector<8x256xf32>
    %cst_9 = arith.constant 1.000000e+00 : f32
    %60 = vector.broadcast %cst_9 : f32 to vector<8x256xf32>
    %61 = arith.addf %60, %59 : vector<8x256xf32>
    %62 = tpu.reciprocal %61 : vector<8x256xf32> -> vector<8x256xf32>
    %c9 = arith.constant 9 : index
    %63 = memref.load %arg1[%c9] : memref<32xf32, #tpu.memory_space<smem>>
    %64 = vector.broadcast %63 : f32 to vector<8x256xf32>
    %65 = arith.mulf %64, %0 : vector<8x256xf32>
    %c21 = arith.constant 21 : index
    %66 = memref.load %arg1[%c21] : memref<32xf32, #tpu.memory_space<smem>>
    %67 = vector.broadcast %66 : f32 to vector<8x256xf32>
    %68 = arith.addf %65, %67 : vector<8x256xf32>
    %c25 = arith.constant 25 : index
    %69 = memref.load %arg1[%c25] : memref<32xf32, #tpu.memory_space<smem>>
    %70 = vector.broadcast %69 : f32 to vector<8x256xf32>
    %71 = arith.mulf %50, %70 : vector<8x256xf32>
    %72 = arith.addf %68, %71 : vector<8x256xf32>
    %73 = math.tanh %72 : vector<8x256xf32>
    %cst_10 = arith.constant 1.000000e+00 : f32
    %74 = vector.broadcast %cst_10 : f32 to vector<8x256xf32>
    %75 = arith.subf %74, %62 : vector<8x256xf32>
    %76 = arith.mulf %75, %73 : vector<8x256xf32>
    %c2 = arith.constant 2 : index
    %77 = memref.load %arg1[%c2] : memref<32xf32, #tpu.memory_space<smem>>
    %78 = vector.broadcast %77 : f32 to vector<8x256xf32>
    %79 = arith.mulf %78, %0 : vector<8x256xf32>
    %c14 = arith.constant 14 : index
    %80 = memref.load %arg1[%c14] : memref<32xf32, #tpu.memory_space<smem>>
    %81 = vector.broadcast %80 : f32 to vector<8x256xf32>
    %82 = arith.addf %79, %81 : vector<8x256xf32>
    %cst_11 = arith.constant 0.000000e+00 : f32
    %83 = vector.broadcast %cst_11 : f32 to vector<8x256xf32>
    %84 = arith.subf %83, %82 : vector<8x256xf32>
    %85 = math.exp %84 : vector<8x256xf32>
    %cst_12 = arith.constant 1.000000e+00 : f32
    %86 = vector.broadcast %cst_12 : f32 to vector<8x256xf32>
    %87 = arith.addf %86, %85 : vector<8x256xf32>
    %88 = tpu.reciprocal %87 : vector<8x256xf32> -> vector<8x256xf32>
    %c6 = arith.constant 6 : index
    %89 = memref.load %arg1[%c6] : memref<32xf32, #tpu.memory_space<smem>>
    %90 = vector.broadcast %89 : f32 to vector<8x256xf32>
    %91 = arith.mulf %90, %0 : vector<8x256xf32>
    %c18 = arith.constant 18 : index
    %92 = memref.load %arg1[%c18] : memref<32xf32, #tpu.memory_space<smem>>
    %93 = vector.broadcast %92 : f32 to vector<8x256xf32>
    %94 = arith.addf %91, %93 : vector<8x256xf32>
    %cst_13 = arith.constant 0.000000e+00 : f32
    %95 = vector.broadcast %cst_13 : f32 to vector<8x256xf32>
    %96 = arith.subf %95, %94 : vector<8x256xf32>
    %97 = math.exp %96 : vector<8x256xf32>
    %cst_14 = arith.constant 1.000000e+00 : f32
    %98 = vector.broadcast %cst_14 : f32 to vector<8x256xf32>
    %99 = arith.addf %98, %97 : vector<8x256xf32>
    %100 = tpu.reciprocal %99 : vector<8x256xf32> -> vector<8x256xf32>
    %c10 = arith.constant 10 : index
    %101 = memref.load %arg1[%c10] : memref<32xf32, #tpu.memory_space<smem>>
    %102 = vector.broadcast %101 : f32 to vector<8x256xf32>
    %103 = arith.mulf %102, %0 : vector<8x256xf32>
    %c22 = arith.constant 22 : index
    %104 = memref.load %arg1[%c22] : memref<32xf32, #tpu.memory_space<smem>>
    %105 = vector.broadcast %104 : f32 to vector<8x256xf32>
    %106 = arith.addf %103, %105 : vector<8x256xf32>
    %c26 = arith.constant 26 : index
    %107 = memref.load %arg1[%c26] : memref<32xf32, #tpu.memory_space<smem>>
    %108 = vector.broadcast %107 : f32 to vector<8x256xf32>
    %109 = arith.mulf %88, %108 : vector<8x256xf32>
    %110 = arith.addf %106, %109 : vector<8x256xf32>
    %111 = math.tanh %110 : vector<8x256xf32>
    %cst_15 = arith.constant 1.000000e+00 : f32
    %112 = vector.broadcast %cst_15 : f32 to vector<8x256xf32>
    %113 = arith.subf %112, %100 : vector<8x256xf32>
    %114 = arith.mulf %113, %111 : vector<8x256xf32>
    %c3 = arith.constant 3 : index
    %115 = memref.load %arg1[%c3] : memref<32xf32, #tpu.memory_space<smem>>
    %116 = vector.broadcast %115 : f32 to vector<8x256xf32>
    %117 = arith.mulf %116, %0 : vector<8x256xf32>
    %c15 = arith.constant 15 : index
    %118 = memref.load %arg1[%c15] : memref<32xf32, #tpu.memory_space<smem>>
    %119 = vector.broadcast %118 : f32 to vector<8x256xf32>
    %120 = arith.addf %117, %119 : vector<8x256xf32>
    %cst_16 = arith.constant 0.000000e+00 : f32
    %121 = vector.broadcast %cst_16 : f32 to vector<8x256xf32>
    %122 = arith.subf %121, %120 : vector<8x256xf32>
    %123 = math.exp %122 : vector<8x256xf32>
    %cst_17 = arith.constant 1.000000e+00 : f32
    %124 = vector.broadcast %cst_17 : f32 to vector<8x256xf32>
    %125 = arith.addf %124, %123 : vector<8x256xf32>
    %126 = tpu.reciprocal %125 : vector<8x256xf32> -> vector<8x256xf32>
    %c7 = arith.constant 7 : index
    %127 = memref.load %arg1[%c7] : memref<32xf32, #tpu.memory_space<smem>>
    %128 = vector.broadcast %127 : f32 to vector<8x256xf32>
    %129 = arith.mulf %128, %0 : vector<8x256xf32>
    %c19 = arith.constant 19 : index
    %130 = memref.load %arg1[%c19] : memref<32xf32, #tpu.memory_space<smem>>
    %131 = vector.broadcast %130 : f32 to vector<8x256xf32>
    %132 = arith.addf %129, %131 : vector<8x256xf32>
    %cst_18 = arith.constant 0.000000e+00 : f32
    %133 = vector.broadcast %cst_18 : f32 to vector<8x256xf32>
    %134 = arith.subf %133, %132 : vector<8x256xf32>
    %135 = math.exp %134 : vector<8x256xf32>
    %cst_19 = arith.constant 1.000000e+00 : f32
    %136 = vector.broadcast %cst_19 : f32 to vector<8x256xf32>
    %137 = arith.addf %136, %135 : vector<8x256xf32>
    %138 = tpu.reciprocal %137 : vector<8x256xf32> -> vector<8x256xf32>
    %c11 = arith.constant 11 : index
    %139 = memref.load %arg1[%c11] : memref<32xf32, #tpu.memory_space<smem>>
    %140 = vector.broadcast %139 : f32 to vector<8x256xf32>
    %141 = arith.mulf %140, %0 : vector<8x256xf32>
    %c23 = arith.constant 23 : index
    %142 = memref.load %arg1[%c23] : memref<32xf32, #tpu.memory_space<smem>>
    %143 = vector.broadcast %142 : f32 to vector<8x256xf32>
    %144 = arith.addf %141, %143 : vector<8x256xf32>
    %c27 = arith.constant 27 : index
    %145 = memref.load %arg1[%c27] : memref<32xf32, #tpu.memory_space<smem>>
    %146 = vector.broadcast %145 : f32 to vector<8x256xf32>
    %147 = arith.mulf %126, %146 : vector<8x256xf32>
    %148 = arith.addf %144, %147 : vector<8x256xf32>
    %149 = math.tanh %148 : vector<8x256xf32>
    %cst_20 = arith.constant 1.000000e+00 : f32
    %150 = vector.broadcast %cst_20 : f32 to vector<8x256xf32>
    %151 = arith.subf %150, %138 : vector<8x256xf32>
    %152 = arith.mulf %151, %149 : vector<8x256xf32>
    %153 = arith.truncf %38 : vector<8x256xf32> to vector<8x256xbf16>
    %154 = arith.truncf %76 : vector<8x256xf32> to vector<8x256xbf16>
    %155 = arith.truncf %114 : vector<8x256xf32> to vector<8x256xbf16>
    %156 = arith.truncf %152 : vector<8x256xf32> to vector<8x256xbf16>
    %c0_21 = arith.constant 0 : index
    %c0_22 = arith.constant 0 : index
    %c0_23 = arith.constant 0 : index
    %157 = vector.load %arg4[%c0_21, %c0_22, %c0_23] : memref<4x256x512xbf16, #tpu.memory_space<vmem>>, vector<1x256x512xbf16>
    %158 = vector.shape_cast %157 : vector<1x256x512xbf16> to vector<256x512xbf16>
    %cst_24 = arith.constant dense<0.000000e+00> : vector<8x512xf32>
    %159 = tpu.matmul %153, %158, %cst_24 {dimension_numbers = #tpu.dot_dimension_numbers<[1], [0], [0], [1], [0, 0, 1, 1], [], []>} : vector<8x256xbf16>, vector<256x512xbf16>, vector<8x512xf32> -> vector<8x512xf32>
    %c1_25 = arith.constant 1 : index
    %c0_26 = arith.constant 0 : index
    %c0_27 = arith.constant 0 : index
    %160 = vector.load %arg4[%c1_25, %c0_26, %c0_27] : memref<4x256x512xbf16, #tpu.memory_space<vmem>>, vector<1x256x512xbf16>
    %161 = vector.shape_cast %160 : vector<1x256x512xbf16> to vector<256x512xbf16>
    %cst_28 = arith.constant dense<0.000000e+00> : vector<8x512xf32>
    %162 = tpu.matmul %154, %161, %cst_28 {dimension_numbers = #tpu.dot_dimension_numbers<[1], [0], [0], [1], [0, 0, 1, 1], [], []>} : vector<8x256xbf16>, vector<256x512xbf16>, vector<8x512xf32> -> vector<8x512xf32>
    %c2_29 = arith.constant 2 : index
    %c0_30 = arith.constant 0 : index
    %c0_31 = arith.constant 0 : index
    %163 = vector.load %arg4[%c2_29, %c0_30, %c0_31] : memref<4x256x512xbf16, #tpu.memory_space<vmem>>, vector<1x256x512xbf16>
    %164 = vector.shape_cast %163 : vector<1x256x512xbf16> to vector<256x512xbf16>
    %cst_32 = arith.constant dense<0.000000e+00> : vector<8x512xf32>
    %165 = tpu.matmul %155, %164, %cst_32 {dimension_numbers = #tpu.dot_dimension_numbers<[1], [0], [0], [1], [0, 0, 1, 1], [], []>} : vector<8x256xbf16>, vector<256x512xbf16>, vector<8x512xf32> -> vector<8x512xf32>
    %166 = arith.addf %159, %165 : vector<8x512xf32>
    %c3_33 = arith.constant 3 : index
    %c0_34 = arith.constant 0 : index
    %c0_35 = arith.constant 0 : index
    %167 = vector.load %arg4[%c3_33, %c0_34, %c0_35] : memref<4x256x512xbf16, #tpu.memory_space<vmem>>, vector<1x256x512xbf16>
    %168 = vector.shape_cast %167 : vector<1x256x512xbf16> to vector<256x512xbf16>
    %cst_36 = arith.constant dense<0.000000e+00> : vector<8x512xf32>
    %169 = tpu.matmul %156, %168, %cst_36 {dimension_numbers = #tpu.dot_dimension_numbers<[1], [0], [0], [1], [0, 0, 1, 1], [], []>} : vector<8x256xbf16>, vector<256x512xbf16>, vector<8x512xf32> -> vector<8x512xf32>
    %170 = arith.addf %162, %169 : vector<8x512xf32>
    %171 = arith.addf %166, %170 : vector<8x512xf32>
    %c0_37 = arith.constant 0 : index
    %c0_38 = arith.constant 0 : index
    %172 = vector.load %arg5[%c0_37, %c0_38] : memref<1x512xf32, #tpu.memory_space<vmem>>, vector<1x512xf32>
    %173 = vector.broadcast %172 : vector<1x512xf32> to vector<8x512xf32>
    %174 = arith.addf %171, %173 : vector<8x512xf32>
    %cst_39 = arith.constant 0.000000e+00 : f32
    %175 = vector.broadcast %cst_39 : f32 to vector<8x512xf32>
    %176 = arith.maximumf %174, %175 : vector<8x512xf32>
    %177 = arith.truncf %176 : vector<8x512xf32> to vector<8x512xbf16>
    %c0_40 = arith.constant 0 : index
    %c0_41 = arith.constant 0 : index
    %178 = vector.load %arg6[%c0_40, %c0_41] : memref<512x256xbf16, #tpu.memory_space<vmem>>, vector<512x256xbf16>
    %cst_42 = arith.constant dense<0.000000e+00> : vector<8x256xf32>
    %179 = tpu.matmul %177, %178, %cst_42 {dimension_numbers = #tpu.dot_dimension_numbers<[1], [0], [0], [1], [0, 0, 1, 1], [], []>} : vector<8x512xbf16>, vector<512x256xbf16>, vector<8x256xf32> -> vector<8x256xf32>
    %c0_43 = arith.constant 0 : index
    %c0_44 = arith.constant 0 : index
    %180 = vector.load %arg7[%c0_43, %c0_44] : memref<1x256xf32, #tpu.memory_space<vmem>>, vector<1x256xf32>
    %181 = vector.broadcast %180 : vector<1x256xf32> to vector<8x256xf32>
    %182 = arith.addf %179, %181 : vector<8x256xf32>
    %c0_45 = arith.constant 0 : index
    %183 = memref.load %arg2[%c0_45] : memref<20xf32, #tpu.memory_space<smem>>
    %184 = vector.broadcast %183 : f32 to vector<8x256xf32>
    %185 = arith.mulf %184, %38 : vector<8x256xf32>
    %c1_46 = arith.constant 1 : index
    %186 = memref.load %arg2[%c1_46] : memref<20xf32, #tpu.memory_space<smem>>
    %187 = vector.broadcast %186 : f32 to vector<8x256xf32>
    %188 = arith.mulf %187, %76 : vector<8x256xf32>
    %189 = arith.addf %185, %188 : vector<8x256xf32>
    %c2_47 = arith.constant 2 : index
    %190 = memref.load %arg2[%c2_47] : memref<20xf32, #tpu.memory_space<smem>>
    %191 = vector.broadcast %190 : f32 to vector<8x256xf32>
    %192 = arith.mulf %191, %114 : vector<8x256xf32>
    %193 = arith.addf %189, %192 : vector<8x256xf32>
    %c3_48 = arith.constant 3 : index
    %194 = memref.load %arg2[%c3_48] : memref<20xf32, #tpu.memory_space<smem>>
    %195 = vector.broadcast %194 : f32 to vector<8x256xf32>
    %196 = arith.mulf %195, %152 : vector<8x256xf32>
    %197 = arith.addf %193, %196 : vector<8x256xf32>
    %c15_49 = arith.constant 15 : index
    %198 = memref.load %arg2[%c15_49] : memref<20xf32, #tpu.memory_space<smem>>
    %199 = vector.broadcast %198 : f32 to vector<8x256xf32>
    %200 = arith.addf %197, %199 : vector<8x256xf32>
    %c12_50 = arith.constant 12 : index
    %201 = memref.load %arg2[%c12_50] : memref<20xf32, #tpu.memory_space<smem>>
    %202 = vector.broadcast %201 : f32 to vector<8x256xf32>
    %203 = arith.mulf %202, %182 : vector<8x256xf32>
    %204 = arith.addf %200, %203 : vector<8x256xf32>
    %cst_51 = arith.constant 0.000000e+00 : f32
    %205 = vector.broadcast %cst_51 : f32 to vector<8x256xf32>
    %206 = arith.subf %205, %204 : vector<8x256xf32>
    %207 = math.exp %206 : vector<8x256xf32>
    %cst_52 = arith.constant 1.000000e+00 : f32
    %208 = vector.broadcast %cst_52 : f32 to vector<8x256xf32>
    %209 = arith.addf %208, %207 : vector<8x256xf32>
    %210 = tpu.reciprocal %209 : vector<8x256xf32> -> vector<8x256xf32>
    %c4_53 = arith.constant 4 : index
    %211 = memref.load %arg2[%c4_53] : memref<20xf32, #tpu.memory_space<smem>>
    %212 = vector.broadcast %211 : f32 to vector<8x256xf32>
    %213 = arith.mulf %212, %38 : vector<8x256xf32>
    %c5_54 = arith.constant 5 : index
    %214 = memref.load %arg2[%c5_54] : memref<20xf32, #tpu.memory_space<smem>>
    %215 = vector.broadcast %214 : f32 to vector<8x256xf32>
    %216 = arith.mulf %215, %76 : vector<8x256xf32>
    %217 = arith.addf %213, %216 : vector<8x256xf32>
    %c6_55 = arith.constant 6 : index
    %218 = memref.load %arg2[%c6_55] : memref<20xf32, #tpu.memory_space<smem>>
    %219 = vector.broadcast %218 : f32 to vector<8x256xf32>
    %220 = arith.mulf %219, %114 : vector<8x256xf32>
    %221 = arith.addf %217, %220 : vector<8x256xf32>
    %c7_56 = arith.constant 7 : index
    %222 = memref.load %arg2[%c7_56] : memref<20xf32, #tpu.memory_space<smem>>
    %223 = vector.broadcast %222 : f32 to vector<8x256xf32>
    %224 = arith.mulf %223, %152 : vector<8x256xf32>
    %225 = arith.addf %221, %224 : vector<8x256xf32>
    %c16_57 = arith.constant 16 : index
    %226 = memref.load %arg2[%c16_57] : memref<20xf32, #tpu.memory_space<smem>>
    %227 = vector.broadcast %226 : f32 to vector<8x256xf32>
    %228 = arith.addf %225, %227 : vector<8x256xf32>
    %c13_58 = arith.constant 13 : index
    %229 = memref.load %arg2[%c13_58] : memref<20xf32, #tpu.memory_space<smem>>
    %230 = vector.broadcast %229 : f32 to vector<8x256xf32>
    %231 = arith.mulf %230, %182 : vector<8x256xf32>
    %232 = arith.addf %228, %231 : vector<8x256xf32>
    %cst_59 = arith.constant 0.000000e+00 : f32
    %233 = vector.broadcast %cst_59 : f32 to vector<8x256xf32>
    %234 = arith.subf %233, %232 : vector<8x256xf32>
    %235 = math.exp %234 : vector<8x256xf32>
    %cst_60 = arith.constant 1.000000e+00 : f32
    %236 = vector.broadcast %cst_60 : f32 to vector<8x256xf32>
    %237 = arith.addf %236, %235 : vector<8x256xf32>
    %238 = tpu.reciprocal %237 : vector<8x256xf32> -> vector<8x256xf32>
    %c8_61 = arith.constant 8 : index
    %239 = memref.load %arg2[%c8_61] : memref<20xf32, #tpu.memory_space<smem>>
    %240 = vector.broadcast %239 : f32 to vector<8x256xf32>
    %241 = arith.mulf %240, %38 : vector<8x256xf32>
    %c9_62 = arith.constant 9 : index
    %242 = memref.load %arg2[%c9_62] : memref<20xf32, #tpu.memory_space<smem>>
    %243 = vector.broadcast %242 : f32 to vector<8x256xf32>
    %244 = arith.mulf %243, %76 : vector<8x256xf32>
    %245 = arith.addf %241, %244 : vector<8x256xf32>
    %c10_63 = arith.constant 10 : index
    %246 = memref.load %arg2[%c10_63] : memref<20xf32, #tpu.memory_space<smem>>
    %247 = vector.broadcast %246 : f32 to vector<8x256xf32>
    %248 = arith.mulf %247, %114 : vector<8x256xf32>
    %249 = arith.addf %245, %248 : vector<8x256xf32>
    %c11_64 = arith.constant 11 : index
    %250 = memref.load %arg2[%c11_64] : memref<20xf32, #tpu.memory_space<smem>>
    %251 = vector.broadcast %250 : f32 to vector<8x256xf32>
    %252 = arith.mulf %251, %152 : vector<8x256xf32>
    %253 = arith.addf %249, %252 : vector<8x256xf32>
    %c17_65 = arith.constant 17 : index
    %254 = memref.load %arg2[%c17_65] : memref<20xf32, #tpu.memory_space<smem>>
    %255 = vector.broadcast %254 : f32 to vector<8x256xf32>
    %256 = arith.addf %253, %255 : vector<8x256xf32>
    %c14_66 = arith.constant 14 : index
    %257 = memref.load %arg2[%c14_66] : memref<20xf32, #tpu.memory_space<smem>>
    %258 = vector.broadcast %257 : f32 to vector<8x256xf32>
    %259 = arith.mulf %258, %182 : vector<8x256xf32>
    %c18_67 = arith.constant 18 : index
    %260 = memref.load %arg2[%c18_67] : memref<20xf32, #tpu.memory_space<smem>>
    %261 = vector.broadcast %260 : f32 to vector<8x256xf32>
    %262 = arith.addf %259, %261 : vector<8x256xf32>
    %263 = arith.mulf %210, %262 : vector<8x256xf32>
    %264 = arith.addf %256, %263 : vector<8x256xf32>
    %265 = math.tanh %264 : vector<8x256xf32>
    %cst_68 = arith.constant 1.000000e+00 : f32
    %266 = vector.broadcast %cst_68 : f32 to vector<8x256xf32>
    %267 = arith.subf %266, %238 : vector<8x256xf32>
    %268 = arith.mulf %267, %265 : vector<8x256xf32>
    %269 = arith.mulf %238, %182 : vector<8x256xf32>
    %270 = arith.addf %268, %269 : vector<8x256xf32>
    %c0_69 = arith.constant 0 : index
    %c0_70 = arith.constant 0 : index
    %271 = vector.load %arg8[%c0_69, %c0_70] : memref<8x256xf32, #tpu.memory_space<vmem>>, vector<8x256xf32>
    tpu.vector_store %arg8[%c0_69, %c0_70], %270 {strides = array<i32>} : memref<8x256xf32, #tpu.memory_space<vmem>>, vector<8x256xf32>,
    return
  }
  func.func @transform_0(%arg0: i32) -> i32 {
    %c0_i32 = arith.constant 0 : i32
    %c0_i32_0 = arith.constant 0 : i32
    return %c0_i32 : i32
  }
  func.func @transform_1(%arg0: i32) -> i32 {
    %c0_i32 = arith.constant 0 : i32
    %c0_i32_0 = arith.constant 0 : i32
    return %c0_i32 : i32
  }
  func.func @transform_2(%arg0: i32) -> (i32, i32) {
    %c0_i32 = arith.constant 0 : i32
    %c0_i32_0 = arith.constant 0 : i32
    return %arg0, %c0_i32 : i32, i32
  }
  func.func @transform_3(%arg0: i32) -> (i32, i32, i32) {
    %c0_i32 = arith.constant 0 : i32
    %c0_i32_0 = arith.constant 0 : i32
    %c0_i32_1 = arith.constant 0 : i32
    %c0_i32_2 = arith.constant 0 : i32
    return %c0_i32, %c0_i32_0, %c0_i32_1 : i32, i32, i32
  }
  func.func @transform_4(%arg0: i32) -> (i32, i32) {
    %c0_i32 = arith.constant 0 : i32
    %c0_i32_0 = arith.constant 0 : i32
    %c0_i32_1 = arith.constant 0 : i32
    return %c0_i32, %c0_i32_0 : i32, i32
  }
  func.func @transform_5(%arg0: i32) -> (i32, i32) {
    %c0_i32 = arith.constant 0 : i32
    %c0_i32_0 = arith.constant 0 : i32
    %c0_i32_1 = arith.constant 0 : i32
    return %c0_i32, %c0_i32_0 : i32, i32
  }
  func.func @transform_6(%arg0: i32) -> (i32, i32) {
    %c0_i32 = arith.constant 0 : i32
    %c0_i32_0 = arith.constant 0 : i32
    %c0_i32_1 = arith.constant 0 : i32
    return %c0_i32, %c0_i32_0 : i32, i32
  }
  func.func @transform_7(%arg0: i32) -> (i32, i32) {
    %c0_i32 = arith.constant 0 : i32
    %c0_i32_0 = arith.constant 0 : i32
    return %arg0, %c0_i32 : i32, i32
  }
}

</mosaic_0001>

<llo_original>
// kernel: gru_simp_forward_batched.1
$region0: #{gru_simp_forward_batched.1}
  #allocation0 [shape = 'u32[]', space=smem, size = 0x4, offset = 0x4, fixed_abs, tag = 'smem constant byte address 0x4 - core index']
  #allocation1 [shape = 'u32[144,128]{1,0:T(1,128)}', space=vmem, size = 0x12000, scoped, tag = 'internal scratch']
  %s0 = inlined_call_operand.vmem [shape: f32[32], index: 0, kind: input, shape index: {}]
  %s1 = inlined_call_operand.vmem [shape: f32[20], index: 1, kind: input, shape index: {}]
  %s2 = inlined_call_operand.vmem [shape: f32[8,256], index: 2, kind: input, shape index: {}]
  %s3 = inlined_call_operand.hbm [shape: bf16[4,256,512], index: 3, kind: input, shape index: {}]
  %s4 = inlined_call_operand.vmem [shape: f32[1,512], index: 4, kind: input, shape index: {}]
  %s5 = inlined_call_operand.hbm [shape: bf16[512,256], index: 5, kind: input, shape index: {}]
  %s6 = inlined_call_operand.vmem [shape: f32[1,256], index: 6, kind: input, shape index: {}]
  %s7 = inlined_call_operand.vmem [shape: f32[8,256], index: 7, kind: output, shape index: {}]
  %s8 = sld [smem:[#allocation0]]
  $region54: #{gru_simp_forward_batched.1} parent=0
    _
  %s10 = ssub.s32 1, %s8
  %s11 = scalar_select 0, %s10, %s8
  $region1: #{gru_simp_forward_batched.1} parent=0
    #allocation2 [shape = 'u8[512]{0}', space=smem, size = 0x200, scoped, tag = 'input window, operand 0, single buffered']
    #allocation3 [shape = 's32[1]{0}', space=sflag, size = 0x4, scoped, tag = 'scoped memory for gru_simp_forward_batched.1']
    #allocation4 [shape = 's32[1]{0}', space=sflag, size = 0x4, scoped, tag = 'scoped memory for gru_simp_forward_batched.1']
    #allocation5 [shape = 'u8[512]{0}', space=smem, size = 0x200, scoped, tag = 'input window, operand 1, single buffered']
    #allocation6 [shape = 's32[1]{0}', space=sflag, size = 0x4, scoped, tag = 'scoped memory for gru_simp_forward_batched.1']
    #allocation7 [shape = 'u8[1048576]{0}', space=vmem, size = 0x100000, scoped, tag = 'input window, operand 3, single buffered']
    #allocation8 [shape = 'u8[262144]{0}', space=vmem, size = 0x40000, scoped, tag = 'input window, operand 5, single buffered']
    #allocation9 [shape = 's32[1]{0}', space=sflag, size = 0x4, scoped, tag = 'scoped memory for gru_simp_forward_batched.1']
    %12 = vsyncpa [#allocation4], 0
    %13 = vsyncpa [#allocation6], 0
    %14 = vsyncpa [#allocation3], 0
    %15 = vsyncpa [#allocation9], 0
    // Predicated region
    $region2: #{gru_simp_forward_batched.1} parent=1 // pred_check
      _
    $region3: #{gru_simp_forward_batched.1} parent=1 // pred_check_branch
      %17 = sbr.rel (0) target = $region5
    $region4: #{gru_simp_forward_batched.1} parent=1 // pred_region
      %s19 = ssub.s32 16, 16
      %20 = vsyncadd [#allocation4], %s19
      %s22 = sshll.u32 %s0, 4
      %s23 = int_to_ptr.vmem [resolvable:$true] %s22
      %25 = dma.vmem_to_smem %s23, 16, [#allocation2], [#allocation4]
    $region5: #{gru_simp_forward_batched.1} parent=1 // pred_fallthru
      _
    // Predicated region
    $region6: #{gru_simp_forward_batched.1} parent=1 // pred_check
      _
    $region7: #{gru_simp_forward_batched.1} parent=1 // pred_check_branch
      %27 = sbr.rel (0) target = $region9
    $region8: #{gru_simp_forward_batched.1} parent=1 // pred_region
      %s29 = ssub.s32 16, 16
      %30 = vsyncadd [#allocation6], %s29
      %s32 = sshll.u32 %s1, 4
      %s33 = int_to_ptr.vmem [resolvable:$true] %s32
      %35 = dma.vmem_to_smem %s33, 16, [#allocation5], [#allocation6]
    $region9: #{gru_simp_forward_batched.1} parent=1 // pred_fallthru
      _
    // Predicated region
    $region10: #{gru_simp_forward_batched.1} parent=1 // pred_check
      _
    $region11: #{gru_simp_forward_batched.1} parent=1 // pred_check_branch
      %37 = sbr.rel (0) target = $region13
    $region12: #{gru_simp_forward_batched.1} parent=1 // pred_region
      _
    $region13: #{gru_simp_forward_batched.1} parent=1 // pred_fallthru
      _
    // Predicated region
    $region14: #{gru_simp_forward_batched.1} parent=1 // pred_check
      _
    $region15: #{gru_simp_forward_batched.1} parent=1 // pred_check_branch
      %39 = sbr.rel (0) target = $region17
    $region16: #{gru_simp_forward_batched.1} parent=1 // pred_region
      %s41 = ssub.s32 32768, 32768
      %42 = vsyncadd [#allocation3], %s41
      %s43 = sshll.u32 [#allocation7], 4
      %s44 = int_to_ptr.vmem [resolvable:$true] %s43
      %49 = dma.hbm_to_vmem [thread:$0]  %s3, 32768, %s44, [#allocation3], 256, 256, 16
    $region17: #{gru_simp_forward_batched.1} parent=1 // pred_fallthru
      _
    // Predicated region
    $region18: #{gru_simp_forward_batched.1} parent=1 // pred_check
      _
    $region19: #{gru_simp_forward_batched.1} parent=1 // pred_check_branch
      %51 = sbr.rel (0) target = $region21
    $region20: #{gru_simp_forward_batched.1} parent=1 // pred_region
      _
    $region21: #{gru_simp_forward_batched.1} parent=1 // pred_fallthru
      _
    // Predicated region
    $region22: #{gru_simp_forward_batched.1} parent=1 // pred_check
      _
    $region23: #{gru_simp_forward_batched.1} parent=1 // pred_check_branch
      %53 = sbr.rel (0) target = $region25
    $region24: #{gru_simp_forward_batched.1} parent=1 // pred_region
      %s55 = ssub.s32 8192, 8192
      %56 = vsyncadd [#allocation9], %s55
      %s57 = sshll.u32 [#allocation8], 4
      %s58 = int_to_ptr.vmem [resolvable:$true] %s57
      %63 = dma.hbm_to_vmem [thread:$0]  %s5, 8192, %s58, [#allocation9], 128, 128, 8
    $region25: #{gru_simp_forward_batched.1} parent=1 // pred_fallthru
      _
    // Predicated region
    $region26: #{gru_simp_forward_batched.1} parent=1 // pred_check
      _
    $region27: #{gru_simp_forward_batched.1} parent=1 // pred_check_branch
      %65 = sbr.rel (0) target = $region29
    $region28: #{gru_simp_forward_batched.1} parent=1 // pred_region
      _
    $region29: #{gru_simp_forward_batched.1} parent=1 // pred_fallthru
      _
    // Predicated region
    $region30: #{gru_simp_forward_batched.1} parent=1 // pred_check
      _
    $region31: #{gru_simp_forward_batched.1} parent=1 // pred_check_branch
      %67 = sbr.rel (0) target = $region33
    $region32: #{gru_simp_forward_batched.1} parent=1 // pred_region
      %68 = dma.done [#allocation4], 16
    $region33: #{gru_simp_forward_batched.1} parent=1 // pred_fallthru
      _
    // Predicated region
    $region34: #{gru_simp_forward_batched.1} parent=1 // pred_check
      _
    $region35: #{gru_simp_forward_batched.1} parent=1 // pred_check_branch
      %70 = sbr.rel (0) target = $region37
    $region36: #{gru_simp_forward_batched.1} parent=1 // pred_region
      %71 = dma.done [#allocation6], 16
    $region37: #{gru_simp_forward_batched.1} parent=1 // pred_fallthru
      _
    // Predicated region
    $region38: #{gru_simp_forward_batched.1} parent=1 // pred_check
      _
    $region39: #{gru_simp_forward_batched.1} parent=1 // pred_check_branch
      %73 = sbr.rel (0) target = $region41
    $region40: #{gru_simp_forward_batched.1} parent=1 // pred_region
      %74 = dma.done [#allocation3], 32768
    $region41: #{gru_simp_forward_batched.1} parent=1 // pred_fallthru
      _
    // Predicated region
    $region42: #{gru_simp_forward_batched.1} parent=1 // pred_check
      _
    $region43: #{gru_simp_forward_batched.1} parent=1 // pred_check_branch
      %76 = sbr.rel (0) target = $region45
    $region44: #{gru_simp_forward_batched.1} parent=1 // pred_region
      %77 = dma.done [#allocation9], 8192
    $region45: #{gru_simp_forward_batched.1} parent=1 // pred_fallthru
      _
    %78 = sfence
    %v79 = vld [vmem:[%s2] sm:$0xff]
    %v80 = vld [vmem:[%s2 + $0x8] sm:$0xff]
    %s81 = sld [smem:[#allocation2]]
    %v82 = vstv %s81
    %v83 = vmul.f32 %v82, %v79
    %v84 = vmul.f32 %v82, %v80
    %s85 = sld [smem:[#allocation2 + $0xc]]
    %v86 = vstv %s85
    %v87 = vadd.f32 %v83, %v86
    %v88 = vadd.f32 %v84, %v86
    %v89 = vsub.f32 0.0, %v87
    %v90 = vsub.f32 0.0, %v88
    %v91 = vmul.f32 %v89, 1.442695
    %v92 = vpow.pop %v91
    %v93 = vmul.f32 %v90, 1.442695
    %v94 = vpow.pop %v93
    %v95 = vadd.f32 %v92, 1.0
    %v96 = vadd.f32 %v94, 1.0
    %v97 = vrcp.pop %v95
    %v98 = vrcp.pop %v96
    %s99 = sld [smem:[#allocation2 + $0x4]]
    %v100 = vstv %s99
    %v101 = vmul.f32 %v100, %v79
    %v102 = vmul.f32 %v100, %v80
    %s103 = sld [smem:[#allocation2 + $0x10]]
    %v104 = vstv %s103
    %v105 = vadd.f32 %v101, %v104
    %v106 = vadd.f32 %v102, %v104
    %v107 = vsub.f32 0.0, %v105
    %v108 = vsub.f32 0.0, %v106
    %v109 = vmul.f32 %v107, 1.442695
    %v110 = vpow.pop %v109
    %v111 = vmul.f32 %v108, 1.442695
    %v112 = vpow.pop %v111
    %v113 = vadd.f32 %v110, 1.0
    %v114 = vadd.f32 %v112, 1.0
    %v115 = vrcp.pop %v113
    %v116 = vrcp.pop %v114
    %s117 = sld [smem:[#allocation2 + $0x8]]
    %v118 = vstv %s117
    %v119 = vmul.f32 %v118, %v79
    %v120 = vmul.f32 %v118, %v80
    %s121 = sld [smem:[#allocation2 + $0x14]]
    %v122 = vstv %s121
    %v123 = vadd.f32 %v119, %v122
    %v124 = vadd.f32 %v120, %v122
    %s125 = sld [smem:[#allocation2 + $0x18]]
    %v126 = vstv %s125
    %v127 = vmul.f32 %v97, %v126
    %v128 = vmul.f32 %v98, %v126
    %v129 = vadd.f32 %v123, %v127
    %v130 = vadd.f32 %v124, %v128
    %v131 = vtanh.pop %v129
    %v132 = vtanh.pop %v130
    %v133 = vsub.f32 1.0, %v115
    %v134 = vsub.f32 1.0, %v116
    %v135 = vmul.f32 %v133, %v131
    %v136 = vmul.f32 %v134, %v132
    %s137 = sld [smem:[#allocation2 + $0x1]]
    %v138 = vstv %s137
    %v139 = vmul.f32 %v138, %v79
    %v140 = vmul.f32 %v138, %v80
    %s141 = sld [smem:[#allocation2 + $0xd]]
    %v142 = vstv %s141
    %v143 = vadd.f32 %v139, %v142
    %v144 = vadd.f32 %v140, %v142
    %v145 = vsub.f32 0.0, %v143
    %v146 = vsub.f32 0.0, %v144
    %v147 = vmul.f32 %v145, 1.442695
    %v148 = vpow.pop %v147
    %v149 = vmul.f32 %v146, 1.442695
    %v150 = vpow.pop %v149
    %v151 = vadd.f32 %v148, 1.0
    %v152 = vadd.f32 %v150, 1.0
    %v153 = vrcp.pop %v151
    %v154 = vrcp.pop %v152
    %s155 = sld [smem:[#allocation2 + $0x5]]
    %v156 = vstv %s155
    %v157 = vmul.f32 %v156, %v79
    %v158 = vmul.f32 %v156, %v80
    %s159 = sld [smem:[#allocation2 + $0x11]]
    %v160 = vstv %s159
    %v161 = vadd.f32 %v157, %v160
    %v162 = vadd.f32 %v158, %v160
    %v163 = vsub.f32 0.0, %v161
    %v164 = vsub.f32 0.0, %v162
    %v165 = vmul.f32 %v163, 1.442695
    %v166 = vpow.pop %v165
    %v167 = vmul.f32 %v164, 1.442695
    %v168 = vpow.pop %v167
    %v169 = vadd.f32 %v166, 1.0
    %v170 = vadd.f32 %v168, 1.0
    %v171 = vrcp.pop %v169
    %v172 = vrcp.pop %v170
    %s173 = sld [smem:[#allocation2 + $0x9]]
    %v174 = vstv %s173
    %v175 = vmul.f32 %v174, %v79
    %v176 = vmul.f32 %v174, %v80
    %s177 = sld [smem:[#allocation2 + $0x15]]
    %v178 = vstv %s177
    %v179 = vadd.f32 %v175, %v178
    %v180 = vadd.f32 %v176, %v178
    %s181 = sld [smem:[#allocation2 + $0x19]]
    %v182 = vstv %s181
    %v183 = vmul.f32 %v153, %v182
    %v184 = vmul.f32 %v154, %v182
    %v185 = vadd.f32 %v179, %v183
    %v186 = vadd.f32 %v180, %v184
    %v187 = vtanh.pop %v185
    %v188 = vtanh.pop %v186
    %v189 = vsub.f32 1.0, %v171
    %v190 = vsub.f32 1.0, %v172
    %v191 = vmul.f32 %v189, %v187
    %v192 = vmul.f32 %v190, %v188
    %s193 = sld [smem:[#allocation2 + $0x2]]
    %v194 = vstv %s193
    %v195 = vmul.f32 %v194, %v79
    %v196 = vmul.f32 %v194, %v80
    %s197 = sld [smem:[#allocation2 + $0xe]]
    %v198 = vstv %s197
    %v199 = vadd.f32 %v195, %v198
    %v200 = vadd.f32 %v196, %v198
    %v201 = vsub.f32 0.0, %v199
    %v202 = vsub.f32 0.0, %v200
    %v203 = vmul.f32 %v201, 1.442695
    %v204 = vpow.pop %v203
    %v205 = vmul.f32 %v202, 1.442695
    %v206 = vpow.pop %v205
    %v207 = vadd.f32 %v204, 1.0
    %v208 = vadd.f32 %v206, 1.0
    %v209 = vrcp.pop %v207
    %v210 = vrcp.pop %v208
    %s211 = sld [smem:[#allocation2 + $0x6]]
    %v212 = vstv %s211
    %v213 = vmul.f32 %v212, %v79
    %v214 = vmul.f32 %v212, %v80
    %s215 = sld [smem:[#allocation2 + $0x12]]
    %v216 = vstv %s215
    %v217 = vadd.f32 %v213, %v216
    %v218 = vadd.f32 %v214, %v216
    %v219 = vsub.f32 0.0, %v217
    %v220 = vsub.f32 0.0, %v218
    %v221 = vmul.f32 %v219, 1.442695
    %v222 = vpow.pop %v221
    %v223 = vmul.f32 %v220, 1.442695
    %v224 = vpow.pop %v223
    %v225 = vadd.f32 %v222, 1.0
    %v226 = vadd.f32 %v224, 1.0
    %v227 = vrcp.pop %v225
    %v228 = vrcp.pop %v226
    %s229 = sld [smem:[#allocation2 + $0xa]]
    %v230 = vstv %s229
    %v231 = vmul.f32 %v230, %v79
    %v232 = vmul.f32 %v230, %v80
    %s233 = sld [smem:[#allocation2 + $0x16]]
    %v234 = vstv %s233
    %v235 = vadd.f32 %v231, %v234
    %v236 = vadd.f32 %v232, %v234
    %s237 = sld [smem:[#allocation2 + $0x1a]]
    %v238 = vstv %s237
    %v239 = vmul.f32 %v209, %v238
    %v240 = vmul.f32 %v210, %v238
    %v241 = vadd.f32 %v235, %v239
    %v242 = vadd.f32 %v236, %v240
    %v243 = vtanh.pop %v241
    %v244 = vtanh.pop %v242
    %v245 = vsub.f32 1.0, %v227
    %v246 = vsub.f32 1.0, %v228
    %v247 = vmul.f32 %v245, %v243
    %v248 = vmul.f32 %v246, %v244
    %s249 = sld [smem:[#allocation2 + $0x3]]
    %v250 = vstv %s249
    %v251 = vmul.f32 %v250, %v79
    %v252 = vmul.f32 %v250, %v80
    %s253 = sld [smem:[#allocation2 + $0xf]]
    %v254 = vstv %s253
    %v255 = vadd.f32 %v251, %v254
    %v256 = vadd.f32 %v252, %v254
    %v257 = vsub.f32 0.0, %v255
    %v258 = vsub.f32 0.0, %v256
    %v259 = vmul.f32 %v257, 1.442695
    %v260 = vpow.pop %v259
    %v261 = vmul.f32 %v258, 1.442695
    %v262 = vpow.pop %v261
    %v263 = vadd.f32 %v260, 1.0
    %v264 = vadd.f32 %v262, 1.0
    %v265 = vrcp.pop %v263
    %v266 = vrcp.pop %v264
    %s267 = sld [smem:[#allocation2 + $0x7]]
    %v268 = vstv %s267
    %v269 = vmul.f32 %v268, %v79
    %v270 = vmul.f32 %v268, %v80
    %s271 = sld [smem:[#allocation2 + $0x13]]
    %v272 = vstv %s271
    %v273 = vadd.f32 %v269, %v272
    %v274 = vadd.f32 %v270, %v272
    %v275 = vsub.f32 0.0, %v273
    %v276 = vsub.f32 0.0, %v274
    %v277 = vmul.f32 %v275, 1.442695
    %v278 = vpow.pop %v277
    %v279 = vmul.f32 %v276, 1.442695
    %v280 = vpow.pop %v279
    %v281 = vadd.f32 %v278, 1.0
    %v282 = vadd.f32 %v280, 1.0
    %v283 = vrcp.pop %v281
    %v284 = vrcp.pop %v282
    %s285 = sld [smem:[#allocation2 + $0xb]]
    %v286 = vstv %s285
    %v287 = vmul.f32 %v286, %v79
    %v288 = vmul.f32 %v286, %v80
    %s289 = sld [smem:[#allocation2 + $0x17]]
    %v290 = vstv %s289
    %v291 = vadd.f32 %v287, %v290
    %v292 = vadd.f32 %v288, %v290
    %s293 = sld [smem:[#allocation2 + $0x1b]]
    %v294 = vstv %s293
    %v295 = vmul.f32 %v265, %v294
    %v296 = vmul.f32 %v266, %v294
    %v297 = vadd.f32 %v291, %v295
    %v298 = vadd.f32 %v292, %v296
    %v299 = vtanh.pop %v297
    %v300 = vtanh.pop %v298
    %v301 = vsub.f32 1.0, %v283
    %v302 = vsub.f32 1.0, %v284
    %v303 = vmul.f32 %v301, %v299
    %v304 = vmul.f32 %v302, %v300
    %v305 = vpack.c.bf16 %v135, %v135
    %v306 = vpack.c.bf16 %v136, %v136
    %v307 = vpack.c.bf16 %v191, %v191
    %v308 = vpack.c.bf16 %v192, %v192
    %v309 = vpack.c.bf16 %v247, %v247
    %v310 = vpack.c.bf16 %v248, %v248
    %v311 = vpack.c.bf16 %v303, %v303
    %v312 = vpack.c.bf16 %v304, %v304
    %v313 = vld [vmem:[#allocation7] sm:$0xff]
    %v314 = vld [vmem:[#allocation7 + $0x8] sm:$0xff]
    %v315 = vld [vmem:[#allocation7 + $0x10] sm:$0xff]
    %v316 = vld [vmem:[#allocation7 + $0x18] sm:$0xff]
    %v317 = vld [vmem:[#allocation7 + $0x20] sm:$0xff]
    %v318 = vld [vmem:[#allocation7 + $0x28] sm:$0xff]
    %v319 = vld [vmem:[#allocation7 + $0x30] sm:$0xff]
    %v320 = vld [vmem:[#allocation7 + $0x38] sm:$0xff]
    %v321 = vld [vmem:[#allocation7 + $0x40] sm:$0xff]
    %v322 = vld [vmem:[#allocation7 + $0x48] sm:$0xff]
    %v323 = vld [vmem:[#allocation7 + $0x50] sm:$0xff]
    %v324 = vld [vmem:[#allocation7 + $0x58] sm:$0xff]
    %v325 = vld [vmem:[#allocation7 + $0x60] sm:$0xff]
    %v326 = vld [vmem:[#allocation7 + $0x68] sm:$0xff]
    %v327 = vld [vmem:[#allocation7 + $0x70] sm:$0xff]
    %v328 = vld [vmem:[#allocation7 + $0x78] sm:$0xff]
    %v329 = vld [vmem:[#allocation7 + $0x80] sm:$0xff]
    %v330 = vld [vmem:[#allocation7 + $0x88] sm:$0xff]
    %v331 = vld [vmem:[#allocation7 + $0x90] sm:$0xff]
    %v332 = vld [vmem:[#allocation7 + $0x98] sm:$0xff]
    %v333 = vld [vmem:[#allocation7 + $0xa0] sm:$0xff]
    %v334 = vld [vmem:[#allocation7 + $0xa8] sm:$0xff]
    %v335 = vld [vmem:[#allocation7 + $0xb0] sm:$0xff]
    %v336 = vld [vmem:[#allocation7 + $0xb8] sm:$0xff]
    %v337 = vld [vmem:[#allocation7 + $0xc0] sm:$0xff]
    %v338 = vld [vmem:[#allocation7 + $0xc8] sm:$0xff]
    %v339 = vld [vmem:[#allocation7 + $0xd0] sm:$0xff]
    %v340 = vld [vmem:[#allocation7 + $0xd8] sm:$0xff]
    %v341 = vld [vmem:[#allocation7 + $0xe0] sm:$0xff]
    %v342 = vld [vmem:[#allocation7 + $0xe8] sm:$0xff]
    %v343 = vld [vmem:[#allocation7 + $0xf0] sm:$0xff]
    %v344 = vld [vmem:[#allocation7 + $0xf8] sm:$0xff]
    %v345 = vld [vmem:[#allocation7 + $0x100] sm:$0xff]
    %v346 = vld [vmem:[#allocation7 + $0x108] sm:$0xff]
    %v347 = vld [vmem:[#allocation7 + $0x110] sm:$0xff]
    %v348 = vld [vmem:[#allocation7 + $0x118] sm:$0xff]
    %v349 = vld [vmem:[#allocation7 + $0x120] sm:$0xff]
    %v350 = vld [vmem:[#allocation7 + $0x128] sm:$0xff]
    %v351 = vld [vmem:[#allocation7 + $0x130] sm:$0xff]
    %v352 = vld [vmem:[#allocation7 + $0x138] sm:$0xff]
    %v353 = vld [vmem:[#allocation7 + $0x140] sm:$0xff]
    %v354 = vld [vmem:[#allocation7 + $0x148] sm:$0xff]
    %v355 = vld [vmem:[#allocation7 + $0x150] sm:$0xff]
    %v356 = vld [vmem:[#allocation7 + $0x158] sm:$0xff]
    %v357 = vld [vmem:[#allocation7 + $0x160] sm:$0xff]
    %v358 = vld [vmem:[#allocation7 + $0x168] sm:$0xff]
    %v359 = vld [vmem:[#allocation7 + $0x170] sm:$0xff]
    %v360 = vld [vmem:[#allocation7 + $0x178] sm:$0xff]
    %v361 = vld [vmem:[#allocation7 + $0x180] sm:$0xff]
    %v362 = vld [vmem:[#allocation7 + $0x188] sm:$0xff]
    %v363 = vld [vmem:[#allocation7 + $0x190] sm:$0xff]
    %v364 = vld [vmem:[#allocation7 + $0x198] sm:$0xff]
    %v365 = vld [vmem:[#allocation7 + $0x1a0] sm:$0xff]
    %v366 = vld [vmem:[#allocation7 + $0x1a8] sm:$0xff]
    %v367 = vld [vmem:[#allocation7 + $0x1b0] sm:$0xff]
    %v368 = vld [vmem:[#allocation7 + $0x1b8] sm:$0xff]
    %v369 = vld [vmem:[#allocation7 + $0x1c0] sm:$0xff]
    %v370 = vld [vmem:[#allocation7 + $0x1c8] sm:$0xff]
    %v371 = vld [vmem:[#allocation7 + $0x1d0] sm:$0xff]
    %v372 = vld [vmem:[#allocation7 + $0x1d8] sm:$0xff]
    %v373 = vld [vmem:[#allocation7 + $0x1e0] sm:$0xff]
    %v374 = vld [vmem:[#allocation7 + $0x1e8] sm:$0xff]
    %v375 = vld [vmem:[#allocation7 + $0x1f0] sm:$0xff]
    %v376 = vld [vmem:[#allocation7 + $0x1f8] sm:$0xff]
    %s377 = scalar_lea.vmem [#allocation7], 512
    %v378 = vld [vmem:[%s377] sm:$0xff]
    %v379 = vld [vmem:[%s377 + $0x8] sm:$0xff]
    %v380 = vld [vmem:[%s377 + $0x10] sm:$0xff]
    %v381 = vld [vmem:[%s377 + $0x18] sm:$0xff]
    %v382 = vld [vmem:[%s377 + $0x20] sm:$0xff]
    %v383 = vld [vmem:[%s377 + $0x28] sm:$0xff]
    %v384 = vld [vmem:[%s377 + $0x30] sm:$0xff]
    %v385 = vld [vmem:[%s377 + $0x38] sm:$0xff]
    %v386 = vld [vmem:[%s377 + $0x40] sm:$0xff]
    %v387 = vld [vmem:[%s377 + $0x48] sm:$0xff]
    %v388 = vld [vmem:[%s377 + $0x50] sm:$0xff]
    %v389 = vld [vmem:[%s377 + $0x58] sm:$0xff]
    %v390 = vld [vmem:[%s377 + $0x60] sm:$0xff]
    %v391 = vld [vmem:[%s377 + $0x68] sm:$0xff]
    %v392 = vld [vmem:[%s377 + $0x70] sm:$0xff]
    %v393 = vld [vmem:[%s377 + $0x78] sm:$0xff]
    %v394 = vld [vmem:[%s377 + $0x80] sm:$0xff]
    %v395 = vld [vmem:[%s377 + $0x88] sm:$0xff]
    %v396 = vld [vmem:[%s377 + $0x90] sm:$0xff]
    %v397 = vld [vmem:[%s377 + $0x98] sm:$0xff]
    %v398 = vld [vmem:[%s377 + $0xa0] sm:$0xff]
    %v399 = vld [vmem:[%s377 + $0xa8] sm:$0xff]
    %v400 = vld [vmem:[%s377 + $0xb0] sm:$0xff]
    %v401 = vld [vmem:[%s377 + $0xb8] sm:$0xff]
    %v402 = vld [vmem:[%s377 + $0xc0] sm:$0xff]
    %v403 = vld [vmem:[%s377 + $0xc8] sm:$0xff]
    %v404 = vld [vmem:[%s377 + $0xd0] sm:$0xff]
    %v405 = vld [vmem:[%s377 + $0xd8] sm:$0xff]
    %v406 = vld [vmem:[%s377 + $0xe0] sm:$0xff]
    %v407 = vld [vmem:[%s377 + $0xe8] sm:$0xff]
    %v408 = vld [vmem:[%s377 + $0xf0] sm:$0xff]
    %v409 = vld [vmem:[%s377 + $0xf8] sm:$0xff]
    %v410 = vld [vmem:[%s377 + $0x100] sm:$0xff]
    %v411 = vld [vmem:[%s377 + $0x108] sm:$0xff]
    %v412 = vld [vmem:[%s377 + $0x110] sm:$0xff]
    %v413 = vld [vmem:[%s377 + $0x118] sm:$0xff]
    %v414 = vld [vmem:[%s377 + $0x120] sm:$0xff]
    %v415 = vld [vmem:[%s377 + $0x128] sm:$0xff]
    %v416 = vld [vmem:[%s377 + $0x130] sm:$0xff]
    %v417 = vld [vmem:[%s377 + $0x138] sm:$0xff]
    %v418 = vld [vmem:[%s377 + $0x140] sm:$0xff]
    %v419 = vld [vmem:[%s377 + $0x148] sm:$0xff]
    %v420 = vld [vmem:[%s377 + $0x150] sm:$0xff]
    %v421 = vld [vmem:[%s377 + $0x158] sm:$0xff]
    %v422 = vld [vmem:[%s377 + $0x160] sm:$0xff]
    %v423 = vld [vmem:[%s377 + $0x168] sm:$0xff]
    %v424 = vld [vmem:[%s377 + $0x170] sm:$0xff]
    %v425 = vld [vmem:[%s377 + $0x178] sm:$0xff]
    %v426 = vld [vmem:[%s377 + $0x180] sm:$0xff]
    %v427 = vld [vmem:[%s377 + $0x188] sm:$0xff]
    %v428 = vld [vmem:[%s377 + $0x190] sm:$0xff]
    %v429 = vld [vmem:[%s377 + $0x198] sm:$0xff]
    %v430 = vld [vmem:[%s377 + $0x1a0] sm:$0xff]
    %v431 = vld [vmem:[%s377 + $0x1a8] sm:$0xff]
    %v432 = vld [vmem:[%s377 + $0x1b0] sm:$0xff]
    %v433 = vld [vmem:[%s377 + $0x1b8] sm:$0xff]
    %v434 = vld [vmem:[%s377 + $0x1c0] sm:$0xff]
    %v435 = vld [vmem:[%s377 + $0x1c8] sm:$0xff]
    %v436 = vld [vmem:[%s377 + $0x1d0] sm:$0xff]
    %v437 = vld [vmem:[%s377 + $0x1d8] sm:$0xff]
    %v438 = vld [vmem:[%s377 + $0x1e0] sm:$0xff]
    %v439 = vld [vmem:[%s377 + $0x1e8] sm:$0xff]
    %v440 = vld [vmem:[%s377 + $0x1f0] sm:$0xff]
    %v441 = vld [vmem:[%s377 + $0x1f8] sm:$0xff]
    %s442 = scalar_lea.vmem [#allocation7], 1024
    %v443 = vld [vmem:[%s442] sm:$0xff]
    %v444 = vld [vmem:[%s442 + $0x8] sm:$0xff]
    %v445 = vld [vmem:[%s442 + $0x10] sm:$0xff]
    %v446 = vld [vmem:[%s442 + $0x18] sm:$0xff]
    %v447 = vld [vmem:[%s442 + $0x20] sm:$0xff]
    %v448 = vld [vmem:[%s442 + $0x28] sm:$0xff]
    %v449 = vld [vmem:[%s442 + $0x30] sm:$0xff]
    %v450 = vld [vmem:[%s442 + $0x38] sm:$0xff]
    %v451 = vld [vmem:[%s442 + $0x40] sm:$0xff]
    %v452 = vld [vmem:[%s442 + $0x48] sm:$0xff]
    %v453 = vld [vmem:[%s442 + $0x50] sm:$0xff]
    %v454 = vld [vmem:[%s442 + $0x58] sm:$0xff]
    %v455 = vld [vmem:[%s442 + $0x60] sm:$0xff]
    %v456 = vld [vmem:[%s442 + $0x68] sm:$0xff]
    %v457 = vld [vmem:[%s442 + $0x70] sm:$0xff]
    %v458 = vld [vmem:[%s442 + $0x78] sm:$0xff]
    %v459 = vld [vmem:[%s442 + $0x80] sm:$0xff]
    %v460 = vld [vmem:[%s442 + $0x88] sm:$0xff]
    %v461 = vld [vmem:[%s442 + $0x90] sm:$0xff]
    %v462 = vld [vmem:[%s442 + $0x98] sm:$0xff]
    %v463 = vld [vmem:[%s442 + $0xa0] sm:$0xff]
    %v464 = vld [vmem:[%s442 + $0xa8] sm:$0xff]
    %v465 = vld [vmem:[%s442 + $0xb0] sm:$0xff]
    %v466 = vld [vmem:[%s442 + $0xb8] sm:$0xff]
    %v467 = vld [vmem:[%s442 + $0xc0] sm:$0xff]
    %v468 = vld [vmem:[%s442 + $0xc8] sm:$0xff]
    %v469 = vld [vmem:[%s442 + $0xd0] sm:$0xff]
    %v470 = vld [vmem:[%s442 + $0xd8] sm:$0xff]
    %v471 = vld [vmem:[%s442 + $0xe0] sm:$0xff]
    %v472 = vld [vmem:[%s442 + $0xe8] sm:$0xff]
    %v473 = vld [vmem:[%s442 + $0xf0] sm:$0xff]
    %v474 = vld [vmem:[%s442 + $0xf8] sm:$0xff]
    %v475 = vld [vmem:[%s442 + $0x100] sm:$0xff]
    %v476 = vld [vmem:[%s442 + $0x108] sm:$0xff]
    %v477 = vld [vmem:[%s442 + $0x110] sm:$0xff]
    %v478 = vld [vmem:[%s442 + $0x118] sm:$0xff]
    %v479 = vld [vmem:[%s442 + $0x120] sm:$0xff]
    %v480 = vld [vmem:[%s442 + $0x128] sm:$0xff]
    %v481 = vld [vmem:[%s442 + $0x130] sm:$0xff]
    %v482 = vld [vmem:[%s442 + $0x138] sm:$0xff]
    %v483 = vld [vmem:[%s442 + $0x140] sm:$0xff]
    %v484 = vld [vmem:[%s442 + $0x148] sm:$0xff]
    %v485 = vld [vmem:[%s442 + $0x150] sm:$0xff]
    %v486 = vld [vmem:[%s442 + $0x158] sm:$0xff]
    %v487 = vld [vmem:[%s442 + $0x160] sm:$0xff]
    %v488 = vld [vmem:[%s442 + $0x168] sm:$0xff]
    %v489 = vld [vmem:[%s442 + $0x170] sm:$0xff]
    %v490 = vld [vmem:[%s442 + $0x178] sm:$0xff]
    %v491 = vld [vmem:[%s442 + $0x180] sm:$0xff]
    %v492 = vld [vmem:[%s442 + $0x188] sm:$0xff]
    %v493 = vld [vmem:[%s442 + $0x190] sm:$0xff]
    %v494 = vld [vmem:[%s442 + $0x198] sm:$0xff]
    %v495 = vld [vmem:[%s442 + $0x1a0] sm:$0xff]
    %v496 = vld [vmem:[%s442 + $0x1a8] sm:$0xff]
    %v497 = vld [vmem:[%s442 + $0x1b0] sm:$0xff]
    %v498 = vld [vmem:[%s442 + $0x1b8] sm:$0xff]
    %v499 = vld [vmem:[%s442 + $0x1c0] sm:$0xff]
    %v500 = vld [vmem:[%s442 + $0x1c8] sm:$0xff]
    %v501 = vld [vmem:[%s442 + $0x1d0] sm:$0xff]
    %v502 = vld [vmem:[%s442 + $0x1d8] sm:$0xff]
    %v503 = vld [vmem:[%s442 + $0x1e0] sm:$0xff]
    %v504 = vld [vmem:[%s442 + $0x1e8] sm:$0xff]
    %v505 = vld [vmem:[%s442 + $0x1f0] sm:$0xff]
    %v506 = vld [vmem:[%s442 + $0x1f8] sm:$0xff]
    %v571 = vunpack.c.l.b16 %v443
    %v572 = vunpack.c.h.b16 %v443
    %v573 = vunpack.c.l.b16 %v444
    %v574 = vunpack.c.h.b16 %v444
    %v575 = vunpack.c.l.b16 %v445
    %v576 = vunpack.c.h.b16 %v445
    %v577 = vunpack.c.l.b16 %v446
    %v578 = vunpack.c.h.b16 %v446
    %v579 = vunpack.c.l.b16 %v447
    %v580 = vunpack.c.h.b16 %v447
    %v581 = vunpack.c.l.b16 %v448
    %v582 = vunpack.c.h.b16 %v448
    %v583 = vunpack.c.l.b16 %v449
    %v584 = vunpack.c.h.b16 %v449
    %v585 = vunpack.c.l.b16 %v450
    %v586 = vunpack.c.h.b16 %v450
    %v587 = vunpack.c.l.b16 %v451
    %v588 = vunpack.c.h.b16 %v451
    %v589 = vunpack.c.l.b16 %v452
    %v590 = vunpack.c.h.b16 %v452
    %v591 = vunpack.c.l.b16 %v453
    %v592 = vunpack.c.h.b16 %v453
    %v593 = vunpack.c.l.b16 %v454
    %v594 = vunpack.c.h.b16 %v454
    %v595 = vunpack.c.l.b16 %v455
    %v596 = vunpack.c.h.b16 %v455
    %v597 = vunpack.c.l.b16 %v456
    %v598 = vunpack.c.h.b16 %v456
    %v599 = vunpack.c.l.b16 %v457
    %v600 = vunpack.c.h.b16 %v457
    %v601 = vunpack.c.l.b16 %v458
    %v602 = vunpack.c.h.b16 %v458
    %v603 = vunpack.c.l.b16 %v459
    %v604 = vunpack.c.h.b16 %v459
    %v605 = vunpack.c.l.b16 %v460
    %v606 = vunpack.c.h.b16 %v460
    %v607 = vunpack.c.l.b16 %v461
    %v608 = vunpack.c.h.b16 %v461
    %v609 = vunpack.c.l.b16 %v462
    %v610 = vunpack.c.h.b16 %v462
    %v611 = vunpack.c.l.b16 %v463
    %v612 = vunpack.c.h.b16 %v463
    %v613 = vunpack.c.l.b16 %v464
    %v614 = vunpack.c.h.b16 %v464
    %v615 = vunpack.c.l.b16 %v465
    %v616 = vunpack.c.h.b16 %v465
    %v617 = vunpack.c.l.b16 %v466
    %v618 = vunpack.c.h.b16 %v466
    %v619 = vunpack.c.l.b16 %v467
    %v620 = vunpack.c.h.b16 %v467
    %v621 = vunpack.c.l.b16 %v468
    %v622 = vunpack.c.h.b16 %v468
    %v623 = vunpack.c.l.b16 %v469
    %v624 = vunpack.c.h.b16 %v469
    %v625 = vunpack.c.l.b16 %v470
    %v626 = vunpack.c.h.b16 %v470
    %v627 = vunpack.c.l.b16 %v471
    %v628 = vunpack.c.h.b16 %v471
    %v629 = vunpack.c.l.b16 %v472
    %v630 = vunpack.c.h.b16 %v472
    %v631 = vunpack.c.l.b16 %v473
    %v632 = vunpack.c.h.b16 %v473
    %v633 = vunpack.c.l.b16 %v474
    %v634 = vunpack.c.h.b16 %v474
    %v635 = vunpack.c.l.b16 %v475
    %v636 = vunpack.c.h.b16 %v475
    %v637 = vunpack.c.l.b16 %v476
    %v638 = vunpack.c.h.b16 %v476
    %v639 = vunpack.c.l.b16 %v477
    %v640 = vunpack.c.h.b16 %v477
    %v641 = vunpack.c.l.b16 %v478
    %v642 = vunpack.c.h.b16 %v478
    %v643 = vunpack.c.l.b16 %v479
    %v644 = vunpack.c.h.b16 %v479
    %v645 = vunpack.c.l.b16 %v480
    %v646 = vunpack.c.h.b16 %v480
    %v647 = vunpack.c.l.b16 %v481
    %v648 = vunpack.c.h.b16 %v481
    %v649 = vunpack.c.l.b16 %v482
    %v650 = vunpack.c.h.b16 %v482
    %v651 = vunpack.c.l.b16 %v483
    %v652 = vunpack.c.h.b16 %v483
    %v653 = vunpack.c.l.b16 %v484
    %v654 = vunpack.c.h.b16 %v484
    %v655 = vunpack.c.l.b16 %v485
    %v656 = vunpack.c.h.b16 %v485
    %v657 = vunpack.c.l.b16 %v486
    %v658 = vunpack.c.h.b16 %v486
    %v659 = vunpack.c.l.b16 %v487
    %v660 = vunpack.c.h.b16 %v487
    %v661 = vunpack.c.l.b16 %v488
    %v662 = vunpack.c.h.b16 %v488
    %v663 = vunpack.c.l.b16 %v489
    %v664 = vunpack.c.h.b16 %v489
    %v665 = vunpack.c.l.b16 %v490
    %v666 = vunpack.c.h.b16 %v490
    %v667 = vunpack.c.l.b16 %v491
    %v668 = vunpack.c.h.b16 %v491
    %v669 = vunpack.c.l.b16 %v492
    %v670 = vunpack.c.h.b16 %v492
    %v671 = vunpack.c.l.b16 %v493
    %v672 = vunpack.c.h.b16 %v493
    %v673 = vunpack.c.l.b16 %v494
    %v674 = vunpack.c.h.b16 %v494
    %v675 = vunpack.c.l.b16 %v495
    %v676 = vunpack.c.h.b16 %v495
    %v677 = vunpack.c.l.b16 %v496
    %v678 = vunpack.c.h.b16 %v496
    %v679 = vunpack.c.l.b16 %v497
    %v680 = vunpack.c.h.b16 %v497
    %v681 = vunpack.c.l.b16 %v498
    %v682 = vunpack.c.h.b16 %v498
    %v683 = vunpack.c.l.b16 %v499
    %v684 = vunpack.c.h.b16 %v499
    %v685 = vunpack.c.l.b16 %v500
    %v686 = vunpack.c.h.b16 %v500
    %v687 = vunpack.c.l.b16 %v501
    %v688 = vunpack.c.h.b16 %v501
    %v689 = vunpack.c.l.b16 %v502
    %v690 = vunpack.c.h.b16 %v502
    %v691 = vunpack.c.l.b16 %v503
    %v692 = vunpack.c.h.b16 %v503
    %v693 = vunpack.c.l.b16 %v504
    %v694 = vunpack.c.h.b16 %v504
    %v695 = vunpack.c.l.b16 %v505
    %v696 = vunpack.c.h.b16 %v505
    %v697 = vunpack.c.l.b16 %v506
    %v698 = vunpack.c.h.b16 %v506
    %v699 = vpack.c.b16 %v575, %v571
    %v700 = vpack.c.b16 %v576, %v572
    %v701 = vpack.c.b16 %v577, %v573
    %v702 = vpack.c.b16 %v578, %v574
    %v703 = vpack.c.b16 %v583, %v579
    %v704 = vpack.c.b16 %v584, %v580
    %v705 = vpack.c.b16 %v585, %v581
    %v706 = vpack.c.b16 %v586, %v582
    %v707 = vpack.c.b16 %v591, %v587
    %v708 = vpack.c.b16 %v592, %v588
    %v709 = vpack.c.b16 %v593, %v589
    %v710 = vpack.c.b16 %v594, %v590
    %v711 = vpack.c.b16 %v599, %v595
    %v712 = vpack.c.b16 %v600, %v596
    %v713 = vpack.c.b16 %v601, %v597
    %v714 = vpack.c.b16 %v602, %v598
    %v715 = vpack.c.b16 %v607, %v603
    %v716 = vpack.c.b16 %v608, %v604
    %v717 = vpack.c.b16 %v609, %v605
    %v718 = vpack.c.b16 %v610, %v606
    %v719 = vpack.c.b16 %v615, %v611
    %v720 = vpack.c.b16 %v616, %v612
    %v721 = vpack.c.b16 %v617, %v613
    %v722 = vpack.c.b16 %v618, %v614
    %v723 = vpack.c.b16 %v623, %v619
    %v724 = vpack.c.b16 %v624, %v620
    %v725 = vpack.c.b16 %v625, %v621
    %v726 = vpack.c.b16 %v626, %v622
    %v727 = vpack.c.b16 %v631, %v627
    %v728 = vpack.c.b16 %v632, %v628
    %v729 = vpack.c.b16 %v633, %v629
    %v730 = vpack.c.b16 %v634, %v630
    %v731 = vpack.c.b16 %v639, %v635
    %v732 = vpack.c.b16 %v640, %v636
    %v733 = vpack.c.b16 %v641, %v637
    %v734 = vpack.c.b16 %v642, %v638
    %v735 = vpack.c.b16 %v647, %v643
    %v736 = vpack.c.b16 %v648, %v644
    %v737 = vpack.c.b16 %v649, %v645
    %v738 = vpack.c.b16 %v650, %v646
    %v739 = vpack.c.b16 %v655, %v651
    %v740 = vpack.c.b16 %v656, %v652
    %v741 = vpack.c.b16 %v657, %v653
    %v742 = vpack.c.b16 %v658, %v654
    %v743 = vpack.c.b16 %v663, %v659
    %v744 = vpack.c.b16 %v664, %v660
    %v745 = vpack.c.b16 %v665, %v661
    %v746 = vpack.c.b16 %v666, %v662
    %v747 = vpack.c.b16 %v671, %v667
    %v748 = vpack.c.b16 %v672, %v668
    %v749 = vpack.c.b16 %v673, %v669
    %v750 = vpack.c.b16 %v674, %v670
    %v751 = vpack.c.b16 %v679, %v675
    %v752 = vpack.c.b16 %v680, %v676
    %v753 = vpack.c.b16 %v681, %v677
    %v754 = vpack.c.b16 %v682, %v678
    %v755 = vpack.c.b16 %v687, %v683
    %v756 = vpack.c.b16 %v688, %v684
    %v757 = vpack.c.b16 %v689, %v685
    %v758 = vpack.c.b16 %v690, %v686
    %v759 = vpack.c.b16 %v695, %v691
    %v760 = vpack.c.b16 %v696, %v692
    %v761 = vpack.c.b16 %v697, %v693
    %v762 = vpack.c.b16 %v698, %v694
    %827 = vmatprep.subr.bf16.mxu0 %v700
    %828 = vmatpush1.bf16.msra.mxu0 %v699
    %829 = vmatprep.subr.bf16.mxu0 %v704
    %830 = vmatpush1.bf16.msra.mxu0 %v703
    %831 = vmatprep.subr.bf16.mxu0 %v708
    %832 = vmatpush1.bf16.msra.mxu0 %v707
    %833 = vmatprep.subr.bf16.mxu0 %v712
    %834 = vmatpush1.bf16.msra.mxu0 %v711
    %835 = vmatprep.subr.bf16.mxu0 %v716
    %836 = vmatpush1.bf16.msra.mxu0 %v715
    %837 = vmatprep.subr.bf16.mxu0 %v720
    %838 = vmatpush1.bf16.msra.mxu0 %v719
    %839 = vmatprep.subr.bf16.mxu0 %v724
    %840 = vmatpush1.bf16.msra.mxu0 %v723
    %841 = vmatprep.subr.bf16.mxu0 %v728
    %842 = vmatpush1.bf16.msra.mxu0 %v727
    %843 = vmatprep.subr.bf16.mxu0 %v732
    %844 = vmatpush1.bf16.msra.mxu0 %v731
    %845 = vmatprep.subr.bf16.mxu0 %v736
    %846 = vmatpush1.bf16.msra.mxu0 %v735
    %847 = vmatprep.subr.bf16.mxu0 %v740
    %848 = vmatpush1.bf16.msra.mxu0 %v739
    %849 = vmatprep.subr.bf16.mxu0 %v744
    %850 = vmatpush1.bf16.msra.mxu0 %v743
    %851 = vmatprep.subr.bf16.mxu0 %v748
    %852 = vmatpush1.bf16.msra.mxu0 %v747
    %853 = vmatprep.subr.bf16.mxu0 %v752
    %854 = vmatpush1.bf16.msra.mxu0 %v751
    %855 = vmatprep.subr.bf16.mxu0 %v756
    %856 = vmatpush1.bf16.msra.mxu0 %v755
    %857 = vmatprep.subr.bf16.mxu0 %v760
    %858 = vmatpush1.bf16.msra.mxu0 %v759
    %859 = vmatprep.mubr.bf16.mxu0 %v310
    %860 = vmatmul.mubr.bf16.gmra.mrb[0].mxu0 %v309
    %v861 = vpop.f32.mrb[0].mxu0
    %v862 = vadd.f32 0.0, %v861
    %v863 = vpop.f32.mrb[0].mxu0
    %v864 = vadd.f32 0.0, %v863
    %v865 = vpop.f32.mrb[0].mxu0
    %v866 = vpop.f32.mrb[0].mxu0
    %867 = vdwg.mxu0
    %868 = vmatprep.subr.bf16.mxu0 %v702
    %869 = vmatpush1.bf16.msra.mxu0 %v701
    %870 = vmatprep.subr.bf16.mxu0 %v706
    %871 = vmatpush1.bf16.msra.mxu0 %v705
    %872 = vmatprep.subr.bf16.mxu0 %v710
    %873 = vmatpush1.bf16.msra.mxu0 %v709
    %874 = vmatprep.subr.bf16.mxu0 %v714
    %875 = vmatpush1.bf16.msra.mxu0 %v713
    %876 = vmatprep.subr.bf16.mxu0 %v718
    %877 = vmatpush1.bf16.msra.mxu0 %v717
    %878 = vmatprep.subr.bf16.mxu0 %v722
    %879 = vmatpush1.bf16.msra.mxu0 %v721
    %880 = vmatprep.subr.bf16.mxu0 %v726
    %881 = vmatpush1.bf16.msra.mxu0 %v725
    %882 = vmatprep.subr.bf16.mxu0 %v730
    %883 = vmatpush1.bf16.msra.mxu0 %v729
    %884 = vmatprep.subr.bf16.mxu0 %v734
    %885 = vmatpush1.bf16.msra.mxu0 %v733
    %886 = vmatprep.subr.bf16.mxu0 %v738
    %887 = vmatpush1.bf16.msra.mxu0 %v737
    %888 = vmatprep.subr.bf16.mxu0 %v742
    %889 = vmatpush1.bf16.msra.mxu0 %v741
    %890 = vmatprep.subr.bf16.mxu0 %v746
    %891 = vmatpush1.bf16.msra.mxu0 %v745
    %892 = vmatprep.subr.bf16.mxu0 %v750
    %893 = vmatpush1.bf16.msra.mxu0 %v749
    %894 = vmatprep.subr.bf16.mxu0 %v754
    %895 = vmatpush1.bf16.msra.mxu0 %v753
    %896 = vmatprep.subr.bf16.mxu0 %v758
    %897 = vmatpush1.bf16.msra.mxu0 %v757
    %898 = vmatprep.subr.bf16.mxu0 %v762
    %899 = vmatpush1.bf16.msra.mxu0 %v761
    %900 = vmatprep.mubr.bf16.mxu0 %v310
    %901 = vmatmul.mubr.bf16.gmra.mrb[0].mxu0 %v309
    %v902 = vpop.f32.mrb[0].mxu0
    %v903 = vadd.f32 0.0, %v902
    %v904 = vpop.f32.mrb[0].mxu0
    %v905 = vadd.f32 0.0, %v904
    %v906 = vpop.f32.mrb[0].mxu0
    %v907 = vpop.f32.mrb[0].mxu0
    %908 = vdwg.mxu0
    %v973 = vunpack.c.l.b16 %v313
    %v974 = vunpack.c.h.b16 %v313
    %v975 = vunpack.c.l.b16 %v314
    %v976 = vunpack.c.h.b16 %v314
    %v977 = vunpack.c.l.b16 %v315
    %v978 = vunpack.c.h.b16 %v315
    %v979 = vunpack.c.l.b16 %v316
    %v980 = vunpack.c.h.b16 %v316
    %v981 = vunpack.c.l.b16 %v317
    %v982 = vunpack.c.h.b16 %v317
    %v983 = vunpack.c.l.b16 %v318
    %v984 = vunpack.c.h.b16 %v318
    %v985 = vunpack.c.l.b16 %v319
    %v986 = vunpack.c.h.b16 %v319
    %v987 = vunpack.c.l.b16 %v320
    %v988 = vunpack.c.h.b16 %v320
    %v989 = vunpack.c.l.b16 %v321
    %v990 = vunpack.c.h.b16 %v321
    %v991 = vunpack.c.l.b16 %v322
    %v992 = vunpack.c.h.b16 %v322
    %v993 = vunpack.c.l.b16 %v323
    %v994 = vunpack.c.h.b16 %v323
    %v995 = vunpack.c.l.b16 %v324
    %v996 = vunpack.c.h.b16 %v324
    %v997 = vunpack.c.l.b16 %v325
    %v998 = vunpack.c.h.b16 %v325
    %v999 = vunpack.c.l.b16 %v326
    %v1000 = vunpack.c.h.b16 %v326
    %v1001 = vunpack.c.l.b16 %v327
    %v1002 = vunpack.c.h.b16 %v327
    %v1003 = vunpack.c.l.b16 %v328
    %v1004 = vunpack.c.h.b16 %v328
    %v1005 = vunpack.c.l.b16 %v329
    %v1006 = vunpack.c.h.b16 %v329
    %v1007 = vunpack.c.l.b16 %v330
    %v1008 = vunpack.c.h.b16 %v330
    %v1009 = vunpack.c.l.b16 %v331
    %v1010 = vunpack.c.h.b16 %v331
    %v1011 = vunpack.c.l.b16 %v332
    %v1012 = vunpack.c.h.b16 %v332
    %v1013 = vunpack.c.l.b16 %v333
    %v1014 = vunpack.c.h.b16 %v333
    %v1015 = vunpack.c.l.b16 %v334
    %v1016 = vunpack.c.h.b16 %v334
    %v1017 = vunpack.c.l.b16 %v335
    %v1018 = vunpack.c.h.b16 %v335
    %v1019 = vunpack.c.l.b16 %v336
    %v1020 = vunpack.c.h.b16 %v336
    %v1021 = vunpack.c.l.b16 %v337
    %v1022 = vunpack.c.h.b16 %v337
    %v1023 = vunpack.c.l.b16 %v338
    %v1024 = vunpack.c.h.b16 %v338
    %v1025 = vunpack.c.l.b16 %v339
    %v1026 = vunpack.c.h.b16 %v339
    %v1027 = vunpack.c.l.b16 %v340
    %v1028 = vunpack.c.h.b16 %v340
    %v1029 = vunpack.c.l.b16 %v341
    %v1030 = vunpack.c.h.b16 %v341
    %v1031 = vunpack.c.l.b16 %v342
    %v1032 = vunpack.c.h.b16 %v342
    %v1033 = vunpack.c.l.b16 %v343
    %v1034 = vunpack.c.h.b16 %v343
    %v1035 = vunpack.c.l.b16 %v344
    %v1036 = vunpack.c.h.b16 %v344
    %v1037 = vunpack.c.l.b16 %v345
    %v1038 = vunpack.c.h.b16 %v345
    %v1039 = vunpack.c.l.b16 %v346
    %v1040 = vunpack.c.h.b16 %v346
    %v1041 = vunpack.c.l.b16 %v347
    %v1042 = vunpack.c.h.b16 %v347
    %v1043 = vunpack.c.l.b16 %v348
    %v1044 = vunpack.c.h.b16 %v348
    %v1045 = vunpack.c.l.b16 %v349
    %v1046 = vunpack.c.h.b16 %v349
    %v1047 = vunpack.c.l.b16 %v350
    %v1048 = vunpack.c.h.b16 %v350
    %v1049 = vunpack.c.l.b16 %v351
    %v1050 = vunpack.c.h.b16 %v351
    %v1051 = vunpack.c.l.b16 %v352
    %v1052 = vunpack.c.h.b16 %v352
    %v1053 = vunpack.c.l.b16 %v353
    %v1054 = vunpack.c.h.b16 %v353
    %v1055 = vunpack.c.l.b16 %v354
    %v1056 = vunpack.c.h.b16 %v354
    %v1057 = vunpack.c.l.b16 %v355
    %v1058 = vunpack.c.h.b16 %v355
    %v1059 = vunpack.c.l.b16 %v356
    %v1060 = vunpack.c.h.b16 %v356
    %v1061 = vunpack.c.l.b16 %v357
    %v1062 = vunpack.c.h.b16 %v357
    %v1063 = vunpack.c.l.b16 %v358
    %v1064 = vunpack.c.h.b16 %v358
    %v1065 = vunpack.c.l.b16 %v359
    %v1066 = vunpack.c.h.b16 %v359
    %v1067 = vunpack.c.l.b16 %v360
    %v1068 = vunpack.c.h.b16 %v360
    %v1069 = vunpack.c.l.b16 %v361
    %v1070 = vunpack.c.h.b16 %v361
    %v1071 = vunpack.c.l.b16 %v362
    %v1072 = vunpack.c.h.b16 %v362
    %v1073 = vunpack.c.l.b16 %v363
    %v1074 = vunpack.c.h.b16 %v363
    %v1075 = vunpack.c.l.b16 %v364
    %v1076 = vunpack.c.h.b16 %v364
    %v1077 = vunpack.c.l.b16 %v365
    %v1078 = vunpack.c.h.b16 %v365
    %v1079 = vunpack.c.l.b16 %v366
    %v1080 = vunpack.c.h.b16 %v366
    %v1081 = vunpack.c.l.b16 %v367
    %v1082 = vunpack.c.h.b16 %v367
    %v1083 = vunpack.c.l.b16 %v368
    %v1084 = vunpack.c.h.b16 %v368
    %v1085 = vunpack.c.l.b16 %v369
    %v1086 = vunpack.c.h.b16 %v369
    %v1087 = vunpack.c.l.b16 %v370
    %v1088 = vunpack.c.h.b16 %v370
    %v1089 = vunpack.c.l.b16 %v371
    %v1090 = vunpack.c.h.b16 %v371
    %v1091 = vunpack.c.l.b16 %v372
    %v1092 = vunpack.c.h.b16 %v372
    %v1093 = vunpack.c.l.b16 %v373
    %v1094 = vunpack.c.h.b16 %v373
    %v1095 = vunpack.c.l.b16 %v374
    %v1096 = vunpack.c.h.b16 %v374
    %v1097 = vunpack.c.l.b16 %v375
    %v1098 = vunpack.c.h.b16 %v375
    %v1099 = vunpack.c.l.b16 %v376
    %v1100 = vunpack.c.h.b16 %v376
    %v1101 = vpack.c.b16 %v977, %v973
    %v1102 = vpack.c.b16 %v978, %v974
    %v1103 = vpack.c.b16 %v979, %v975
    %v1104 = vpack.c.b16 %v980, %v976
    %v1105 = vpack.c.b16 %v985, %v981
    %v1106 = vpack.c.b16 %v986, %v982
    %v1107 = vpack.c.b16 %v987, %v983
    %v1108 = vpack.c.b16 %v988, %v984
    %v1109 = vpack.c.b16 %v993, %v989
    %v1110 = vpack.c.b16 %v994, %v990
    %v1111 = vpack.c.b16 %v995, %v991
    %v1112 = vpack.c.b16 %v996, %v992
    %v1113 = vpack.c.b16 %v1001, %v997
    %v1114 = vpack.c.b16 %v1002, %v998
    %v1115 = vpack.c.b16 %v1003, %v999
    %v1116 = vpack.c.b16 %v1004, %v1000
    %v1117 = vpack.c.b16 %v1009, %v1005
    %v1118 = vpack.c.b16 %v1010, %v1006
    %v1119 = vpack.c.b16 %v1011, %v1007
    %v1120 = vpack.c.b16 %v1012, %v1008
    %v1121 = vpack.c.b16 %v1017, %v1013
    %v1122 = vpack.c.b16 %v1018, %v1014
    %v1123 = vpack.c.b16 %v1019, %v1015
    %v1124 = vpack.c.b16 %v1020, %v1016
    %v1125 = vpack.c.b16 %v1025, %v1021
    %v1126 = vpack.c.b16 %v1026, %v1022
    %v1127 = vpack.c.b16 %v1027, %v1023
    %v1128 = vpack.c.b16 %v1028, %v1024
    %v1129 = vpack.c.b16 %v1033, %v1029
    %v1130 = vpack.c.b16 %v1034, %v1030
    %v1131 = vpack.c.b16 %v1035, %v1031
    %v1132 = vpack.c.b16 %v1036, %v1032
    %v1133 = vpack.c.b16 %v1041, %v1037
    %v1134 = vpack.c.b16 %v1042, %v1038
    %v1135 = vpack.c.b16 %v1043, %v1039
    %v1136 = vpack.c.b16 %v1044, %v1040
    %v1137 = vpack.c.b16 %v1049, %v1045
    %v1138 = vpack.c.b16 %v1050, %v1046
    %v1139 = vpack.c.b16 %v1051, %v1047
    %v1140 = vpack.c.b16 %v1052, %v1048
    %v1141 = vpack.c.b16 %v1057, %v1053
    %v1142 = vpack.c.b16 %v1058, %v1054
    %v1143 = vpack.c.b16 %v1059, %v1055
    %v1144 = vpack.c.b16 %v1060, %v1056
    %v1145 = vpack.c.b16 %v1065, %v1061
    %v1146 = vpack.c.b16 %v1066, %v1062
    %v1147 = vpack.c.b16 %v1067, %v1063
    %v1148 = vpack.c.b16 %v1068, %v1064
    %v1149 = vpack.c.b16 %v1073, %v1069
    %v1150 = vpack.c.b16 %v1074, %v1070
    %v1151 = vpack.c.b16 %v1075, %v1071
    %v1152 = vpack.c.b16 %v1076, %v1072
    %v1153 = vpack.c.b16 %v1081, %v1077
    %v1154 = vpack.c.b16 %v1082, %v1078
    %v1155 = vpack.c.b16 %v1083, %v1079
    %v1156 = vpack.c.b16 %v1084, %v1080
    %v1157 = vpack.c.b16 %v1089, %v1085
    %v1158 = vpack.c.b16 %v1090, %v1086
    %v1159 = vpack.c.b16 %v1091, %v1087
    %v1160 = vpack.c.b16 %v1092, %v1088
    %v1161 = vpack.c.b16 %v1097, %v1093
    %v1162 = vpack.c.b16 %v1098, %v1094
    %v1163 = vpack.c.b16 %v1099, %v1095
    %v1164 = vpack.c.b16 %v1100, %v1096
    %1229 = vmatprep.subr.bf16.mxu0 %v1102
    %1230 = vmatpush1.bf16.msra.mxu0 %v1101
    %1231 = vmatprep.subr.bf16.mxu0 %v1106
    %1232 = vmatpush1.bf16.msra.mxu0 %v1105
    %1233 = vmatprep.subr.bf16.mxu0 %v1110
    %1234 = vmatpush1.bf16.msra.mxu0 %v1109
    %1235 = vmatprep.subr.bf16.mxu0 %v1114
    %1236 = vmatpush1.bf16.msra.mxu0 %v1113
    %1237 = vmatprep.subr.bf16.mxu0 %v1118
    %1238 = vmatpush1.bf16.msra.mxu0 %v1117
    %1239 = vmatprep.subr.bf16.mxu0 %v1122
    %1240 = vmatpush1.bf16.msra.mxu0 %v1121
    %1241 = vmatprep.subr.bf16.mxu0 %v1126
    %1242 = vmatpush1.bf16.msra.mxu0 %v1125
    %1243 = vmatprep.subr.bf16.mxu0 %v1130
    %1244 = vmatpush1.bf16.msra.mxu0 %v1129
    %1245 = vmatprep.subr.bf16.mxu0 %v1134
    %1246 = vmatpush1.bf16.msra.mxu0 %v1133
    %1247 = vmatprep.subr.bf16.mxu0 %v1138
    %1248 = vmatpush1.bf16.msra.mxu0 %v1137
    %1249 = vmatprep.subr.bf16.mxu0 %v1142
    %1250 = vmatpush1.bf16.msra.mxu0 %v1141
    %1251 = vmatprep.subr.bf16.mxu0 %v1146
    %1252 = vmatpush1.bf16.msra.mxu0 %v1145
    %1253 = vmatprep.subr.bf16.mxu0 %v1150
    %1254 = vmatpush1.bf16.msra.mxu0 %v1149
    %1255 = vmatprep.subr.bf16.mxu0 %v1154
    %1256 = vmatpush1.bf16.msra.mxu0 %v1153
    %1257 = vmatprep.subr.bf16.mxu0 %v1158
    %1258 = vmatpush1.bf16.msra.mxu0 %v1157
    %1259 = vmatprep.subr.bf16.mxu0 %v1162
    %1260 = vmatpush1.bf16.msra.mxu0 %v1161
    %1261 = vmatprep.mubr.bf16.mxu0 %v306
    %1262 = vmatmul.mubr.bf16.gmra.mrb[0].mxu0 %v305
    %v1263 = vpop.f32.mrb[0].mxu0
    %v1264 = vadd.f32 %v862, %v1263
    %v1265 = vpop.f32.mrb[0].mxu0
    %v1266 = vadd.f32 %v864, %v1265
    %v1267 = vpop.f32.mrb[0].mxu0
    %v1268 = vpop.f32.mrb[0].mxu0
    %1269 = vdwg.mxu0
    %1270 = vmatprep.subr.bf16.mxu0 %v1104
    %1271 = vmatpush1.bf16.msra.mxu0 %v1103
    %1272 = vmatprep.subr.bf16.mxu0 %v1108
    %1273 = vmatpush1.bf16.msra.mxu0 %v1107
    %1274 = vmatprep.subr.bf16.mxu0 %v1112
    %1275 = vmatpush1.bf16.msra.mxu0 %v1111
    %1276 = vmatprep.subr.bf16.mxu0 %v1116
    %1277 = vmatpush1.bf16.msra.mxu0 %v1115
    %1278 = vmatprep.subr.bf16.mxu0 %v1120
    %1279 = vmatpush1.bf16.msra.mxu0 %v1119
    %1280 = vmatprep.subr.bf16.mxu0 %v1124
    %1281 = vmatpush1.bf16.msra.mxu0 %v1123
    %1282 = vmatprep.subr.bf16.mxu0 %v1128
    %1283 = vmatpush1.bf16.msra.mxu0 %v1127
    %1284 = vmatprep.subr.bf16.mxu0 %v1132
    %1285 = vmatpush1.bf16.msra.mxu0 %v1131
    %1286 = vmatprep.subr.bf16.mxu0 %v1136
    %1287 = vmatpush1.bf16.msra.mxu0 %v1135
    %1288 = vmatprep.subr.bf16.mxu0 %v1140
    %1289 = vmatpush1.bf16.msra.mxu0 %v1139
    %1290 = vmatprep.subr.bf16.mxu0 %v1144
    %1291 = vmatpush1.bf16.msra.mxu0 %v1143
    %1292 = vmatprep.subr.bf16.mxu0 %v1148
    %1293 = vmatpush1.bf16.msra.mxu0 %v1147
    %1294 = vmatprep.subr.bf16.mxu0 %v1152
    %1295 = vmatpush1.bf16.msra.mxu0 %v1151
    %1296 = vmatprep.subr.bf16.mxu0 %v1156
    %1297 = vmatpush1.bf16.msra.mxu0 %v1155
    %1298 = vmatprep.subr.bf16.mxu0 %v1160
    %1299 = vmatpush1.bf16.msra.mxu0 %v1159
    %1300 = vmatprep.subr.bf16.mxu0 %v1164
    %1301 = vmatpush1.bf16.msra.mxu0 %v1163
    %1302 = vmatprep.mubr.bf16.mxu0 %v306
    %1303 = vmatmul.mubr.bf16.gmra.mrb[0].mxu0 %v305
    %v1304 = vpop.f32.mrb[0].mxu0
    %v1305 = vadd.f32 %v903, %v1304
    %v1306 = vpop.f32.mrb[0].mxu0
    %v1307 = vadd.f32 %v905, %v1306
    %v1308 = vpop.f32.mrb[0].mxu0
    %v1309 = vpop.f32.mrb[0].mxu0
    %1310 = vdwg.mxu0
    %s1311 = scalar_lea.vmem [#allocation7], 1536
    %v1312 = vld [vmem:[%s1311] sm:$0xff]
    %v1313 = vld [vmem:[%s1311 + $0x8] sm:$0xff]
    %v1314 = vld [vmem:[%s1311 + $0x10] sm:$0xff]
    %v1315 = vld [vmem:[%s1311 + $0x18] sm:$0xff]
    %v1316 = vld [vmem:[%s1311 + $0x20] sm:$0xff]
    %v1317 = vld [vmem:[%s1311 + $0x28] sm:$0xff]
    %v1318 = vld [vmem:[%s1311 + $0x30] sm:$0xff]
    %v1319 = vld [vmem:[%s1311 + $0x38] sm:$0xff]
    %v1320 = vld [vmem:[%s1311 + $0x40] sm:$0xff]
    %v1321 = vld [vmem:[%s1311 + $0x48] sm:$0xff]
    %v1322 = vld [vmem:[%s1311 + $0x50] sm:$0xff]
    %v1323 = vld [vmem:[%s1311 + $0x58] sm:$0xff]
    %v1324 = vld [vmem:[%s1311 + $0x60] sm:$0xff]
    %v1325 = vld [vmem:[%s1311 + $0x68] sm:$0xff]
    %v1326 = vld [vmem:[%s1311 + $0x70] sm:$0xff]
    %v1327 = vld [vmem:[%s1311 + $0x78] sm:$0xff]
    %v1328 = vld [vmem:[%s1311 + $0x80] sm:$0xff]
    %v1329 = vld [vmem:[%s1311 + $0x88] sm:$0xff]
    %v1330 = vld [vmem:[%s1311 + $0x90] sm:$0xff]
    %v1331 = vld [vmem:[%s1311 + $0x98] sm:$0xff]
    %v1332 = vld [vmem:[%s1311 + $0xa0] sm:$0xff]
    %v1333 = vld [vmem:[%s1311 + $0xa8] sm:$0xff]
    %v1334 = vld [vmem:[%s1311 + $0xb0] sm:$0xff]
    %v1335 = vld [vmem:[%s1311 + $0xb8] sm:$0xff]
    %v1336 = vld [vmem:[%s1311 + $0xc0] sm:$0xff]
    %v1337 = vld [vmem:[%s1311 + $0xc8] sm:$0xff]
    %v1338 = vld [vmem:[%s1311 + $0xd0] sm:$0xff]
    %v1339 = vld [vmem:[%s1311 + $0xd8] sm:$0xff]
    %v1340 = vld [vmem:[%s1311 + $0xe0] sm:$0xff]
    %v1341 = vld [vmem:[%s1311 + $0xe8] sm:$0xff]
    %v1342 = vld [vmem:[%s1311 + $0xf0] sm:$0xff]
    %v1343 = vld [vmem:[%s1311 + $0xf8] sm:$0xff]
    %v1344 = vld [vmem:[%s1311 + $0x100] sm:$0xff]
    %v1345 = vld [vmem:[%s1311 + $0x108] sm:$0xff]
    %v1346 = vld [vmem:[%s1311 + $0x110] sm:$0xff]
    %v1347 = vld [vmem:[%s1311 + $0x118] sm:$0xff]
    %v1348 = vld [vmem:[%s1311 + $0x120] sm:$0xff]
    %v1349 = vld [vmem:[%s1311 + $0x128] sm:$0xff]
    %v1350 = vld [vmem:[%s1311 + $0x130] sm:$0xff]
    %v1351 = vld [vmem:[%s1311 + $0x138] sm:$0xff]
    %v1352 = vld [vmem:[%s1311 + $0x140] sm:$0xff]
    %v1353 = vld [vmem:[%s1311 + $0x148] sm:$0xff]
    %v1354 = vld [vmem:[%s1311 + $0x150] sm:$0xff]
    %v1355 = vld [vmem:[%s1311 + $0x158] sm:$0xff]
    %v1356 = vld [vmem:[%s1311 + $0x160] sm:$0xff]
    %v1357 = vld [vmem:[%s1311 + $0x168] sm:$0xff]
    %v1358 = vld [vmem:[%s1311 + $0x170] sm:$0xff]
    %v1359 = vld [vmem:[%s1311 + $0x178] sm:$0xff]
    %v1360 = vld [vmem:[%s1311 + $0x180] sm:$0xff]
    %v1361 = vld [vmem:[%s1311 + $0x188] sm:$0xff]
    %v1362 = vld [vmem:[%s1311 + $0x190] sm:$0xff]
    %v1363 = vld [vmem:[%s1311 + $0x198] sm:$0xff]
    %v1364 = vld [vmem:[%s1311 + $0x1a0] sm:$0xff]
    %v1365 = vld [vmem:[%s1311 + $0x1a8] sm:$0xff]
    %v1366 = vld [vmem:[%s1311 + $0x1b0] sm:$0xff]
    %v1367 = vld [vmem:[%s1311 + $0x1b8] sm:$0xff]
    %v1368 = vld [vmem:[%s1311 + $0x1c0] sm:$0xff]
    %v1369 = vld [vmem:[%s1311 + $0x1c8] sm:$0xff]
    %v1370 = vld [vmem:[%s1311 + $0x1d0] sm:$0xff]
    %v1371 = vld [vmem:[%s1311 + $0x1d8] sm:$0xff]
    %v1372 = vld [vmem:[%s1311 + $0x1e0] sm:$0xff]
    %v1373 = vld [vmem:[%s1311 + $0x1e8] sm:$0xff]
    %v1374 = vld [vmem:[%s1311 + $0x1f0] sm:$0xff]
    %v1375 = vld [vmem:[%s1311 + $0x1f8] sm:$0xff]
    %v1440 = vunpack.c.l.b16 %v1312
    %v1441 = vunpack.c.h.b16 %v1312
    %v1442 = vunpack.c.l.b16 %v1313
    %v1443 = vunpack.c.h.b16 %v1313
    %v1444 = vunpack.c.l.b16 %v1314
    %v1445 = vunpack.c.h.b16 %v1314
    %v1446 = vunpack.c.l.b16 %v1315
    %v1447 = vunpack.c.h.b16 %v1315
    %v1448 = vunpack.c.l.b16 %v1316
    %v1449 = vunpack.c.h.b16 %v1316
    %v1450 = vunpack.c.l.b16 %v1317
    %v1451 = vunpack.c.h.b16 %v1317
    %v1452 = vunpack.c.l.b16 %v1318
    %v1453 = vunpack.c.h.b16 %v1318
    %v1454 = vunpack.c.l.b16 %v1319
    %v1455 = vunpack.c.h.b16 %v1319
    %v1456 = vunpack.c.l.b16 %v1320
    %v1457 = vunpack.c.h.b16 %v1320
    %v1458 = vunpack.c.l.b16 %v1321
    %v1459 = vunpack.c.h.b16 %v1321
    %v1460 = vunpack.c.l.b16 %v1322
    %v1461 = vunpack.c.h.b16 %v1322
    %v1462 = vunpack.c.l.b16 %v1323
    %v1463 = vunpack.c.h.b16 %v1323
    %v1464 = vunpack.c.l.b16 %v1324
    %v1465 = vunpack.c.h.b16 %v1324
    %v1466 = vunpack.c.l.b16 %v1325
    %v1467 = vunpack.c.h.b16 %v1325
    %v1468 = vunpack.c.l.b16 %v1326
    %v1469 = vunpack.c.h.b16 %v1326
    %v1470 = vunpack.c.l.b16 %v1327
    %v1471 = vunpack.c.h.b16 %v1327
    %v1472 = vunpack.c.l.b16 %v1328
    %v1473 = vunpack.c.h.b16 %v1328
    %v1474 = vunpack.c.l.b16 %v1329
    %v1475 = vunpack.c.h.b16 %v1329
    %v1476 = vunpack.c.l.b16 %v1330
    %v1477 = vunpack.c.h.b16 %v1330
    %v1478 = vunpack.c.l.b16 %v1331
    %v1479 = vunpack.c.h.b16 %v1331
    %v1480 = vunpack.c.l.b16 %v1332
    %v1481 = vunpack.c.h.b16 %v1332
    %v1482 = vunpack.c.l.b16 %v1333
    %v1483 = vunpack.c.h.b16 %v1333
    %v1484 = vunpack.c.l.b16 %v1334
    %v1485 = vunpack.c.h.b16 %v1334
    %v1486 = vunpack.c.l.b16 %v1335
    %v1487 = vunpack.c.h.b16 %v1335
    %v1488 = vunpack.c.l.b16 %v1336
    %v1489 = vunpack.c.h.b16 %v1336
    %v1490 = vunpack.c.l.b16 %v1337
    %v1491 = vunpack.c.h.b16 %v1337
    %v1492 = vunpack.c.l.b16 %v1338
    %v1493 = vunpack.c.h.b16 %v1338
    %v1494 = vunpack.c.l.b16 %v1339
    %v1495 = vunpack.c.h.b16 %v1339
    %v1496 = vunpack.c.l.b16 %v1340
    %v1497 = vunpack.c.h.b16 %v1340
    %v1498 = vunpack.c.l.b16 %v1341
    %v1499 = vunpack.c.h.b16 %v1341
    %v1500 = vunpack.c.l.b16 %v1342
    %v1501 = vunpack.c.h.b16 %v1342
    %v1502 = vunpack.c.l.b16 %v1343
    %v1503 = vunpack.c.h.b16 %v1343
    %v1504 = vunpack.c.l.b16 %v1344
    %v1505 = vunpack.c.h.b16 %v1344
    %v1506 = vunpack.c.l.b16 %v1345
    %v1507 = vunpack.c.h.b16 %v1345
    %v1508 = vunpack.c.l.b16 %v1346
    %v1509 = vunpack.c.h.b16 %v1346
    %v1510 = vunpack.c.l.b16 %v1347
    %v1511 = vunpack.c.h.b16 %v1347
    %v1512 = vunpack.c.l.b16 %v1348
    %v1513 = vunpack.c.h.b16 %v1348
    %v1514 = vunpack.c.l.b16 %v1349
    %v1515 = vunpack.c.h.b16 %v1349
    %v1516 = vunpack.c.l.b16 %v1350
    %v1517 = vunpack.c.h.b16 %v1350
    %v1518 = vunpack.c.l.b16 %v1351
    %v1519 = vunpack.c.h.b16 %v1351
    %v1520 = vunpack.c.l.b16 %v1352
    %v1521 = vunpack.c.h.b16 %v1352
    %v1522 = vunpack.c.l.b16 %v1353
    %v1523 = vunpack.c.h.b16 %v1353
    %v1524 = vunpack.c.l.b16 %v1354
    %v1525 = vunpack.c.h.b16 %v1354
    %v1526 = vunpack.c.l.b16 %v1355
    %v1527 = vunpack.c.h.b16 %v1355
    %v1528 = vunpack.c.l.b16 %v1356
    %v1529 = vunpack.c.h.b16 %v1356
    %v1530 = vunpack.c.l.b16 %v1357
    %v1531 = vunpack.c.h.b16 %v1357
    %v1532 = vunpack.c.l.b16 %v1358
    %v1533 = vunpack.c.h.b16 %v1358
    %v1534 = vunpack.c.l.b16 %v1359
    %v1535 = vunpack.c.h.b16 %v1359
    %v1536 = vunpack.c.l.b16 %v1360
    %v1537 = vunpack.c.h.b16 %v1360
    %v1538 = vunpack.c.l.b16 %v1361
    %v1539 = vunpack.c.h.b16 %v1361
    %v1540 = vunpack.c.l.b16 %v1362
    %v1541 = vunpack.c.h.b16 %v1362
    %v1542 = vunpack.c.l.b16 %v1363
    %v1543 = vunpack.c.h.b16 %v1363
    %v1544 = vunpack.c.l.b16 %v1364
    %v1545 = vunpack.c.h.b16 %v1364
    %v1546 = vunpack.c.l.b16 %v1365
    %v1547 = vunpack.c.h.b16 %v1365
    %v1548 = vunpack.c.l.b16 %v1366
    %v1549 = vunpack.c.h.b16 %v1366
    %v1550 = vunpack.c.l.b16 %v1367
    %v1551 = vunpack.c.h.b16 %v1367
    %v1552 = vunpack.c.l.b16 %v1368
    %v1553 = vunpack.c.h.b16 %v1368
    %v1554 = vunpack.c.l.b16 %v1369
    %v1555 = vunpack.c.h.b16 %v1369
    %v1556 = vunpack.c.l.b16 %v1370
    %v1557 = vunpack.c.h.b16 %v1370
    %v1558 = vunpack.c.l.b16 %v1371
    %v1559 = vunpack.c.h.b16 %v1371
    %v1560 = vunpack.c.l.b16 %v1372
    %v1561 = vunpack.c.h.b16 %v1372
    %v1562 = vunpack.c.l.b16 %v1373
    %v1563 = vunpack.c.h.b16 %v1373
    %v1564 = vunpack.c.l.b16 %v1374
    %v1565 = vunpack.c.h.b16 %v1374
    %v1566 = vunpack.c.l.b16 %v1375
    %v1567 = vunpack.c.h.b16 %v1375
    %v1568 = vpack.c.b16 %v1444, %v1440
    %v1569 = vpack.c.b16 %v1445, %v1441
    %v1570 = vpack.c.b16 %v1446, %v1442
    %v1571 = vpack.c.b16 %v1447, %v1443
    %v1572 = vpack.c.b16 %v1452, %v1448
    %v1573 = vpack.c.b16 %v1453, %v1449
    %v1574 = vpack.c.b16 %v1454, %v1450
    %v1575 = vpack.c.b16 %v1455, %v1451
    %v1576 = vpack.c.b16 %v1460, %v1456
    %v1577 = vpack.c.b16 %v1461, %v1457
    %v1578 = vpack.c.b16 %v1462, %v1458
    %v1579 = vpack.c.b16 %v1463, %v1459
    %v1580 = vpack.c.b16 %v1468, %v1464
    %v1581 = vpack.c.b16 %v1469, %v1465
    %v1582 = vpack.c.b16 %v1470, %v1466
    %v1583 = vpack.c.b16 %v1471, %v1467
    %v1584 = vpack.c.b16 %v1476, %v1472
    %v1585 = vpack.c.b16 %v1477, %v1473
    %v1586 = vpack.c.b16 %v1478, %v1474
    %v1587 = vpack.c.b16 %v1479, %v1475
    %v1588 = vpack.c.b16 %v1484, %v1480
    %v1589 = vpack.c.b16 %v1485, %v1481
    %v1590 = vpack.c.b16 %v1486, %v1482
    %v1591 = vpack.c.b16 %v1487, %v1483
    %v1592 = vpack.c.b16 %v1492, %v1488
    %v1593 = vpack.c.b16 %v1493, %v1489
    %v1594 = vpack.c.b16 %v1494, %v1490
    %v1595 = vpack.c.b16 %v1495, %v1491
    %v1596 = vpack.c.b16 %v1500, %v1496
    %v1597 = vpack.c.b16 %v1501, %v1497
    %v1598 = vpack.c.b16 %v1502, %v1498
    %v1599 = vpack.c.b16 %v1503, %v1499
    %v1600 = vpack.c.b16 %v1508, %v1504
    %v1601 = vpack.c.b16 %v1509, %v1505
    %v1602 = vpack.c.b16 %v1510, %v1506
    %v1603 = vpack.c.b16 %v1511, %v1507
    %v1604 = vpack.c.b16 %v1516, %v1512
    %v1605 = vpack.c.b16 %v1517, %v1513
    %v1606 = vpack.c.b16 %v1518, %v1514
    %v1607 = vpack.c.b16 %v1519, %v1515
    %v1608 = vpack.c.b16 %v1524, %v1520
    %v1609 = vpack.c.b16 %v1525, %v1521
    %v1610 = vpack.c.b16 %v1526, %v1522
    %v1611 = vpack.c.b16 %v1527, %v1523
    %v1612 = vpack.c.b16 %v1532, %v1528
    %v1613 = vpack.c.b16 %v1533, %v1529
    %v1614 = vpack.c.b16 %v1534, %v1530
    %v1615 = vpack.c.b16 %v1535, %v1531
    %v1616 = vpack.c.b16 %v1540, %v1536
    %v1617 = vpack.c.b16 %v1541, %v1537
    %v1618 = vpack.c.b16 %v1542, %v1538
    %v1619 = vpack.c.b16 %v1543, %v1539
    %v1620 = vpack.c.b16 %v1548, %v1544
    %v1621 = vpack.c.b16 %v1549, %v1545
    %v1622 = vpack.c.b16 %v1550, %v1546
    %v1623 = vpack.c.b16 %v1551, %v1547
    %v1624 = vpack.c.b16 %v1556, %v1552
    %v1625 = vpack.c.b16 %v1557, %v1553
    %v1626 = vpack.c.b16 %v1558, %v1554
    %v1627 = vpack.c.b16 %v1559, %v1555
    %v1628 = vpack.c.b16 %v1564, %v1560
    %v1629 = vpack.c.b16 %v1565, %v1561
    %v1630 = vpack.c.b16 %v1566, %v1562
    %v1631 = vpack.c.b16 %v1567, %v1563
    %1696 = vmatprep.subr.bf16.mxu0 %v1569
    %1697 = vmatpush1.bf16.msra.mxu0 %v1568
    %1698 = vmatprep.subr.bf16.mxu0 %v1573
    %1699 = vmatpush1.bf16.msra.mxu0 %v1572
    %1700 = vmatprep.subr.bf16.mxu0 %v1577
    %1701 = vmatpush1.bf16.msra.mxu0 %v1576
    %1702 = vmatprep.subr.bf16.mxu0 %v1581
    %1703 = vmatpush1.bf16.msra.mxu0 %v1580
    %1704 = vmatprep.subr.bf16.mxu0 %v1585
    %1705 = vmatpush1.bf16.msra.mxu0 %v1584
    %1706 = vmatprep.subr.bf16.mxu0 %v1589
    %1707 = vmatpush1.bf16.msra.mxu0 %v1588
    %1708 = vmatprep.subr.bf16.mxu0 %v1593
    %1709 = vmatpush1.bf16.msra.mxu0 %v1592
    %1710 = vmatprep.subr.bf16.mxu0 %v1597
    %1711 = vmatpush1.bf16.msra.mxu0 %v1596
    %1712 = vmatprep.subr.bf16.mxu0 %v1601
    %1713 = vmatpush1.bf16.msra.mxu0 %v1600
    %1714 = vmatprep.subr.bf16.mxu0 %v1605
    %1715 = vmatpush1.bf16.msra.mxu0 %v1604
    %1716 = vmatprep.subr.bf16.mxu0 %v1609
    %1717 = vmatpush1.bf16.msra.mxu0 %v1608
    %1718 = vmatprep.subr.bf16.mxu0 %v1613
    %1719 = vmatpush1.bf16.msra.mxu0 %v1612
    %1720 = vmatprep.subr.bf16.mxu0 %v1617
    %1721 = vmatpush1.bf16.msra.mxu0 %v1616
    %1722 = vmatprep.subr.bf16.mxu0 %v1621
    %1723 = vmatpush1.bf16.msra.mxu0 %v1620
    %1724 = vmatprep.subr.bf16.mxu0 %v1625
    %1725 = vmatpush1.bf16.msra.mxu0 %v1624
    %1726 = vmatprep.subr.bf16.mxu0 %v1629
    %1727 = vmatpush1.bf16.msra.mxu0 %v1628
    %1728 = vmatprep.mubr.bf16.mxu0 %v312
    %1729 = vmatmul.mubr.bf16.gmra.mrb[0].mxu0 %v311
    %v1730 = vpop.f32.mrb[0].mxu0
    %v1731 = vadd.f32 0.0, %v1730
    %v1732 = vpop.f32.mrb[0].mxu0
    %v1733 = vadd.f32 0.0, %v1732
    %v1734 = vpop.f32.mrb[0].mxu0
    %v1735 = vpop.f32.mrb[0].mxu0
    %1736 = vdwg.mxu0
    %1737 = vmatprep.subr.bf16.mxu0 %v1571
    %1738 = vmatpush1.bf16.msra.mxu0 %v1570
    %1739 = vmatprep.subr.bf16.mxu0 %v1575
    %1740 = vmatpush1.bf16.msra.mxu0 %v1574
    %1741 = vmatprep.subr.bf16.mxu0 %v1579
    %1742 = vmatpush1.bf16.msra.mxu0 %v1578
    %1743 = vmatprep.subr.bf16.mxu0 %v1583
    %1744 = vmatpush1.bf16.msra.mxu0 %v1582
    %1745 = vmatprep.subr.bf16.mxu0 %v1587
    %1746 = vmatpush1.bf16.msra.mxu0 %v1586
    %1747 = vmatprep.subr.bf16.mxu0 %v1591
    %1748 = vmatpush1.bf16.msra.mxu0 %v1590
    %1749 = vmatprep.subr.bf16.mxu0 %v1595
    %1750 = vmatpush1.bf16.msra.mxu0 %v1594
    %1751 = vmatprep.subr.bf16.mxu0 %v1599
    %1752 = vmatpush1.bf16.msra.mxu0 %v1598
    %1753 = vmatprep.subr.bf16.mxu0 %v1603
    %1754 = vmatpush1.bf16.msra.mxu0 %v1602
    %1755 = vmatprep.subr.bf16.mxu0 %v1607
    %1756 = vmatpush1.bf16.msra.mxu0 %v1606
    %1757 = vmatprep.subr.bf16.mxu0 %v1611
    %1758 = vmatpush1.bf16.msra.mxu0 %v1610
    %1759 = vmatprep.subr.bf16.mxu0 %v1615
    %1760 = vmatpush1.bf16.msra.mxu0 %v1614
    %1761 = vmatprep.subr.bf16.mxu0 %v1619
    %1762 = vmatpush1.bf16.msra.mxu0 %v1618
    %1763 = vmatprep.subr.bf16.mxu0 %v1623
    %1764 = vmatpush1.bf16.msra.mxu0 %v1622
    %1765 = vmatprep.subr.bf16.mxu0 %v1627
    %1766 = vmatpush1.bf16.msra.mxu0 %v1626
    %1767 = vmatprep.subr.bf16.mxu0 %v1631
    %1768 = vmatpush1.bf16.msra.mxu0 %v1630
    %1769 = vmatprep.mubr.bf16.mxu0 %v312
    %1770 = vmatmul.mubr.bf16.gmra.mrb[0].mxu0 %v311
    %v1771 = vpop.f32.mrb[0].mxu0
    %v1772 = vadd.f32 0.0, %v1771
    %v1773 = vpop.f32.mrb[0].mxu0
    %v1774 = vadd.f32 0.0, %v1773
    %v1775 = vpop.f32.mrb[0].mxu0
    %v1776 = vpop.f32.mrb[0].mxu0
    %1777 = vdwg.mxu0
    %v1842 = vunpack.c.l.b16 %v378
    %v1843 = vunpack.c.h.b16 %v378
    %v1844 = vunpack.c.l.b16 %v379
    %v1845 = vunpack.c.h.b16 %v379
    %v1846 = vunpack.c.l.b16 %v380
    %v1847 = vunpack.c.h.b16 %v380
    %v1848 = vunpack.c.l.b16 %v381
    %v1849 = vunpack.c.h.b16 %v381
    %v1850 = vunpack.c.l.b16 %v382
    %v1851 = vunpack.c.h.b16 %v382
    %v1852 = vunpack.c.l.b16 %v383
    %v1853 = vunpack.c.h.b16 %v383
    %v1854 = vunpack.c.l.b16 %v384
    %v1855 = vunpack.c.h.b16 %v384
    %v1856 = vunpack.c.l.b16 %v385
    %v1857 = vunpack.c.h.b16 %v385
    %v1858 = vunpack.c.l.b16 %v386
    %v1859 = vunpack.c.h.b16 %v386
    %v1860 = vunpack.c.l.b16 %v387
    %v1861 = vunpack.c.h.b16 %v387
    %v1862 = vunpack.c.l.b16 %v388
    %v1863 = vunpack.c.h.b16 %v388
    %v1864 = vunpack.c.l.b16 %v389
    %v1865 = vunpack.c.h.b16 %v389
    %v1866 = vunpack.c.l.b16 %v390
    %v1867 = vunpack.c.h.b16 %v390
    %v1868 = vunpack.c.l.b16 %v391
    %v1869 = vunpack.c.h.b16 %v391
    %v1870 = vunpack.c.l.b16 %v392
    %v1871 = vunpack.c.h.b16 %v392
    %v1872 = vunpack.c.l.b16 %v393
    %v1873 = vunpack.c.h.b16 %v393
    %v1874 = vunpack.c.l.b16 %v394
    %v1875 = vunpack.c.h.b16 %v394
    %v1876 = vunpack.c.l.b16 %v395
    %v1877 = vunpack.c.h.b16 %v395
    %v1878 = vunpack.c.l.b16 %v396
    %v1879 = vunpack.c.h.b16 %v396
    %v1880 = vunpack.c.l.b16 %v397
    %v1881 = vunpack.c.h.b16 %v397
    %v1882 = vunpack.c.l.b16 %v398
    %v1883 = vunpack.c.h.b16 %v398
    %v1884 = vunpack.c.l.b16 %v399
    %v1885 = vunpack.c.h.b16 %v399
    %v1886 = vunpack.c.l.b16 %v400
    %v1887 = vunpack.c.h.b16 %v400
    %v1888 = vunpack.c.l.b16 %v401
    %v1889 = vunpack.c.h.b16 %v401
    %v1890 = vunpack.c.l.b16 %v402
    %v1891 = vunpack.c.h.b16 %v402
    %v1892 = vunpack.c.l.b16 %v403
    %v1893 = vunpack.c.h.b16 %v403
    %v1894 = vunpack.c.l.b16 %v404
    %v1895 = vunpack.c.h.b16 %v404
    %v1896 = vunpack.c.l.b16 %v405
    %v1897 = vunpack.c.h.b16 %v405
    %v1898 = vunpack.c.l.b16 %v406
    %v1899 = vunpack.c.h.b16 %v406
    %v1900 = vunpack.c.l.b16 %v407
    %v1901 = vunpack.c.h.b16 %v407
    %v1902 = vunpack.c.l.b16 %v408
    %v1903 = vunpack.c.h.b16 %v408
    %v1904 = vunpack.c.l.b16 %v409
    %v1905 = vunpack.c.h.b16 %v409
    %v1906 = vunpack.c.l.b16 %v410
    %v1907 = vunpack.c.h.b16 %v410
    %v1908 = vunpack.c.l.b16 %v411
    %v1909 = vunpack.c.h.b16 %v411
    %v1910 = vunpack.c.l.b16 %v412
    %v1911 = vunpack.c.h.b16 %v412
    %v1912 = vunpack.c.l.b16 %v413
    %v1913 = vunpack.c.h.b16 %v413
    %v1914 = vunpack.c.l.b16 %v414
    %v1915 = vunpack.c.h.b16 %v414
    %v1916 = vunpack.c.l.b16 %v415
    %v1917 = vunpack.c.h.b16 %v415
    %v1918 = vunpack.c.l.b16 %v416
    %v1919 = vunpack.c.h.b16 %v416
    %v1920 = vunpack.c.l.b16 %v417
    %v1921 = vunpack.c.h.b16 %v417
    %v1922 = vunpack.c.l.b16 %v418
    %v1923 = vunpack.c.h.b16 %v418
    %v1924 = vunpack.c.l.b16 %v419
    %v1925 = vunpack.c.h.b16 %v419
    %v1926 = vunpack.c.l.b16 %v420
    %v1927 = vunpack.c.h.b16 %v420
    %v1928 = vunpack.c.l.b16 %v421
    %v1929 = vunpack.c.h.b16 %v421
    %v1930 = vunpack.c.l.b16 %v422
    %v1931 = vunpack.c.h.b16 %v422
    %v1932 = vunpack.c.l.b16 %v423
    %v1933 = vunpack.c.h.b16 %v423
    %v1934 = vunpack.c.l.b16 %v424
    %v1935 = vunpack.c.h.b16 %v424
    %v1936 = vunpack.c.l.b16 %v425
    %v1937 = vunpack.c.h.b16 %v425
    %v1938 = vunpack.c.l.b16 %v426
    %v1939 = vunpack.c.h.b16 %v426
    %v1940 = vunpack.c.l.b16 %v427
    %v1941 = vunpack.c.h.b16 %v427
    %v1942 = vunpack.c.l.b16 %v428
    %v1943 = vunpack.c.h.b16 %v428
    %v1944 = vunpack.c.l.b16 %v429
    %v1945 = vunpack.c.h.b16 %v429
    %v1946 = vunpack.c.l.b16 %v430
    %v1947 = vunpack.c.h.b16 %v430
    %v1948 = vunpack.c.l.b16 %v431
    %v1949 = vunpack.c.h.b16 %v431
    %v1950 = vunpack.c.l.b16 %v432
    %v1951 = vunpack.c.h.b16 %v432
    %v1952 = vunpack.c.l.b16 %v433
    %v1953 = vunpack.c.h.b16 %v433
    %v1954 = vunpack.c.l.b16 %v434
    %v1955 = vunpack.c.h.b16 %v434
    %v1956 = vunpack.c.l.b16 %v435
    %v1957 = vunpack.c.h.b16 %v435
    %v1958 = vunpack.c.l.b16 %v436
    %v1959 = vunpack.c.h.b16 %v436
    %v1960 = vunpack.c.l.b16 %v437
    %v1961 = vunpack.c.h.b16 %v437
    %v1962 = vunpack.c.l.b16 %v438
    %v1963 = vunpack.c.h.b16 %v438
    %v1964 = vunpack.c.l.b16 %v439
    %v1965 = vunpack.c.h.b16 %v439
    %v1966 = vunpack.c.l.b16 %v440
    %v1967 = vunpack.c.h.b16 %v440
    %v1968 = vunpack.c.l.b16 %v441
    %v1969 = vunpack.c.h.b16 %v441
    %v1970 = vpack.c.b16 %v1846, %v1842
    %v1971 = vpack.c.b16 %v1847, %v1843
    %v1972 = vpack.c.b16 %v1848, %v1844
    %v1973 = vpack.c.b16 %v1849, %v1845
    %v1974 = vpack.c.b16 %v1854, %v1850
    %v1975 = vpack.c.b16 %v1855, %v1851
    %v1976 = vpack.c.b16 %v1856, %v1852
    %v1977 = vpack.c.b16 %v1857, %v1853
    %v1978 = vpack.c.b16 %v1862, %v1858
    %v1979 = vpack.c.b16 %v1863, %v1859
    %v1980 = vpack.c.b16 %v1864, %v1860
    %v1981 = vpack.c.b16 %v1865, %v1861
    %v1982 = vpack.c.b16 %v1870, %v1866
    %v1983 = vpack.c.b16 %v1871, %v1867
    %v1984 = vpack.c.b16 %v1872, %v1868
    %v1985 = vpack.c.b16 %v1873, %v1869
    %v1986 = vpack.c.b16 %v1878, %v1874
    %v1987 = vpack.c.b16 %v1879, %v1875
    %v1988 = vpack.c.b16 %v1880, %v1876
    %v1989 = vpack.c.b16 %v1881, %v1877
    %v1990 = vpack.c.b16 %v1886, %v1882
    %v1991 = vpack.c.b16 %v1887, %v1883
    %v1992 = vpack.c.b16 %v1888, %v1884
    %v1993 = vpack.c.b16 %v1889, %v1885
    %v1994 = vpack.c.b16 %v1894, %v1890
    %v1995 = vpack.c.b16 %v1895, %v1891
    %v1996 = vpack.c.b16 %v1896, %v1892
    %v1997 = vpack.c.b16 %v1897, %v1893
    %v1998 = vpack.c.b16 %v1902, %v1898
    %v1999 = vpack.c.b16 %v1903, %v1899
    %v2000 = vpack.c.b16 %v1904, %v1900
    %v2001 = vpack.c.b16 %v1905, %v1901
    %v2002 = vpack.c.b16 %v1910, %v1906
    %v2003 = vpack.c.b16 %v1911, %v1907
    %v2004 = vpack.c.b16 %v1912, %v1908
    %v2005 = vpack.c.b16 %v1913, %v1909
    %v2006 = vpack.c.b16 %v1918, %v1914
    %v2007 = vpack.c.b16 %v1919, %v1915
    %v2008 = vpack.c.b16 %v1920, %v1916
    %v2009 = vpack.c.b16 %v1921, %v1917
    %v2010 = vpack.c.b16 %v1926, %v1922
    %v2011 = vpack.c.b16 %v1927, %v1923
    %v2012 = vpack.c.b16 %v1928, %v1924
    %v2013 = vpack.c.b16 %v1929, %v1925
    %v2014 = vpack.c.b16 %v1934, %v1930
    %v2015 = vpack.c.b16 %v1935, %v1931
    %v2016 = vpack.c.b16 %v1936, %v1932
    %v2017 = vpack.c.b16 %v1937, %v1933
    %v2018 = vpack.c.b16 %v1942, %v1938
    %v2019 = vpack.c.b16 %v1943, %v1939
    %v2020 = vpack.c.b16 %v1944, %v1940
    %v2021 = vpack.c.b16 %v1945, %v1941
    %v2022 = vpack.c.b16 %v1950, %v1946
    %v2023 = vpack.c.b16 %v1951, %v1947
    %v2024 = vpack.c.b16 %v1952, %v1948
    %v2025 = vpack.c.b16 %v1953, %v1949
    %v2026 = vpack.c.b16 %v1958, %v1954
    %v2027 = vpack.c.b16 %v1959, %v1955
    %v2028 = vpack.c.b16 %v1960, %v1956
    %v2029 = vpack.c.b16 %v1961, %v1957
    %v2030 = vpack.c.b16 %v1966, %v1962
    %v2031 = vpack.c.b16 %v1967, %v1963
    %v2032 = vpack.c.b16 %v1968, %v1964
    %v2033 = vpack.c.b16 %v1969, %v1965
    %2098 = vmatprep.subr.bf16.mxu0 %v1971
    %2099 = vmatpush1.bf16.msra.mxu0 %v1970
    %2100 = vmatprep.subr.bf16.mxu0 %v1975
    %2101 = vmatpush1.bf16.msra.mxu0 %v1974
    %2102 = vmatprep.subr.bf16.mxu0 %v1979
    %2103 = vmatpush1.bf16.msra.mxu0 %v1978
    %2104 = vmatprep.subr.bf16.mxu0 %v1983
    %2105 = vmatpush1.bf16.msra.mxu0 %v1982
    %2106 = vmatprep.subr.bf16.mxu0 %v1987
    %2107 = vmatpush1.bf16.msra.mxu0 %v1986
    %2108 = vmatprep.subr.bf16.mxu0 %v1991
    %2109 = vmatpush1.bf16.msra.mxu0 %v1990
    %2110 = vmatprep.subr.bf16.mxu0 %v1995
    %2111 = vmatpush1.bf16.msra.mxu0 %v1994
    %2112 = vmatprep.subr.bf16.mxu0 %v1999
    %2113 = vmatpush1.bf16.msra.mxu0 %v1998
    %2114 = vmatprep.subr.bf16.mxu0 %v2003
    %2115 = vmatpush1.bf16.msra.mxu0 %v2002
    %2116 = vmatprep.subr.bf16.mxu0 %v2007
    %2117 = vmatpush1.bf16.msra.mxu0 %v2006
    %2118 = vmatprep.subr.bf16.mxu0 %v2011
    %2119 = vmatpush1.bf16.msra.mxu0 %v2010
    %2120 = vmatprep.subr.bf16.mxu0 %v2015
    %2121 = vmatpush1.bf16.msra.mxu0 %v2014
    %2122 = vmatprep.subr.bf16.mxu0 %v2019
    %2123 = vmatpush1.bf16.msra.mxu0 %v2018
    %2124 = vmatprep.subr.bf16.mxu0 %v2023
    %2125 = vmatpush1.bf16.msra.mxu0 %v2022
    %2126 = vmatprep.subr.bf16.mxu0 %v2027
    %2127 = vmatpush1.bf16.msra.mxu0 %v2026
    %2128 = vmatprep.subr.bf16.mxu0 %v2031
    %2129 = vmatpush1.bf16.msra.mxu0 %v2030
    %2130 = vmatprep.mubr.bf16.mxu0 %v308
    %2131 = vmatmul.mubr.bf16.gmra.mrb[0].mxu0 %v307
    %v2132 = vpop.f32.mrb[0].mxu0
    %v2133 = vadd.f32 %v1731, %v2132
    %v2134 = vpop.f32.mrb[0].mxu0
    %v2135 = vadd.f32 %v1733, %v2134
    %v2136 = vpop.f32.mrb[0].mxu0
    %v2137 = vpop.f32.mrb[0].mxu0
    %2138 = vdwg.mxu0
    %2139 = vmatprep.subr.bf16.mxu0 %v1973
    %2140 = vmatpush1.bf16.msra.mxu0 %v1972
    %2141 = vmatprep.subr.bf16.mxu0 %v1977
    %2142 = vmatpush1.bf16.msra.mxu0 %v1976
    %2143 = vmatprep.subr.bf16.mxu0 %v1981
    %2144 = vmatpush1.bf16.msra.mxu0 %v1980
    %2145 = vmatprep.subr.bf16.mxu0 %v1985
    %2146 = vmatpush1.bf16.msra.mxu0 %v1984
    %2147 = vmatprep.subr.bf16.mxu0 %v1989
    %2148 = vmatpush1.bf16.msra.mxu0 %v1988
    %2149 = vmatprep.subr.bf16.mxu0 %v1993
    %2150 = vmatpush1.bf16.msra.mxu0 %v1992
    %2151 = vmatprep.subr.bf16.mxu0 %v1997
    %2152 = vmatpush1.bf16.msra.mxu0 %v1996
    %2153 = vmatprep.subr.bf16.mxu0 %v2001
    %2154 = vmatpush1.bf16.msra.mxu0 %v2000
    %2155 = vmatprep.subr.bf16.mxu0 %v2005
    %2156 = vmatpush1.bf16.msra.mxu0 %v2004
    %2157 = vmatprep.subr.bf16.mxu0 %v2009
    %2158 = vmatpush1.bf16.msra.mxu0 %v2008
    %2159 = vmatprep.subr.bf16.mxu0 %v2013
    %2160 = vmatpush1.bf16.msra.mxu0 %v2012
    %2161 = vmatprep.subr.bf16.mxu0 %v2017
    %2162 = vmatpush1.bf16.msra.mxu0 %v2016
    %2163 = vmatprep.subr.bf16.mxu0 %v2021
    %2164 = vmatpush1.bf16.msra.mxu0 %v2020
    %2165 = vmatprep.subr.bf16.mxu0 %v2025
    %2166 = vmatpush1.bf16.msra.mxu0 %v2024
    %2167 = vmatprep.subr.bf16.mxu0 %v2029
    %2168 = vmatpush1.bf16.msra.mxu0 %v2028
    %2169 = vmatprep.subr.bf16.mxu0 %v2033
    %2170 = vmatpush1.bf16.msra.mxu0 %v2032
    %2171 = vmatprep.mubr.bf16.mxu0 %v308
    %2172 = vmatmul.mubr.bf16.gmra.mrb[0].mxu0 %v307
    %v2173 = vpop.f32.mrb[0].mxu0
    %v2174 = vadd.f32 %v1772, %v2173
    %v2175 = vpop.f32.mrb[0].mxu0
    %v2176 = vadd.f32 %v1774, %v2175
    %v2177 = vpop.f32.mrb[0].mxu0
    %v2178 = vpop.f32.mrb[0].mxu0
    %2179 = vdwg.mxu0
    %v2180 = vadd.f32 %v1264, %v2133
    %v2181 = vadd.f32 %v1266, %v2135
    %v2182 = vadd.f32 %v1305, %v2174
    %v2183 = vadd.f32 %v1307, %v2176
    %v2184 = vld [vmem:[%s4] sm:$0xf]
    %v2186 = vlaneseq
    %v2187 = vshrl.u32 %v2186, 7
    %v2188 = vsub.s32 0, %v2187
    %v2189 = vrot.slane %v2184, %v2188
    %v2190 = vlaneseq
    %v2191 = vshrl.u32 %v2190, 7
    %v2192 = vsub.s32 1, %v2191
    %v2193 = vrot.slane %v2184, %v2192
    %v2194 = vlaneseq
    %v2195 = vshrl.u32 %v2194, 7
    %v2196 = vsub.s32 2, %v2195
    %v2197 = vrot.slane %v2184, %v2196
    %v2198 = vlaneseq
    %v2199 = vshrl.u32 %v2198, 7
    %v2200 = vsub.s32 3, %v2199
    %v2201 = vrot.slane %v2184, %v2200
    %v2206 = vadd.f32 %v2180, %v2189
    %v2207 = vadd.f32 %v2181, %v2193
    %v2208 = vadd.f32 %v2182, %v2197
    %v2209 = vadd.f32 %v2183, %v2201
    %v2210 = vmax.f32 %v2206, 0.0
    %v2211 = vmax.f32 %v2207, 0.0
    %v2212 = vmax.f32 %v2208, 0.0
    %v2213 = vmax.f32 %v2209, 0.0
    %v2214 = vpack.c.bf16 %v2210, %v2210
    %v2215 = vpack.c.bf16 %v2211, %v2211
    %v2216 = vpack.c.bf16 %v2212, %v2212
    %v2217 = vpack.c.bf16 %v2213, %v2213
    %v2218 = vld [vmem:[#allocation8] sm:$0xff]
    %v2219 = vld [vmem:[#allocation8 + $0x8] sm:$0xff]
    %v2220 = vld [vmem:[#allocation8 + $0x10] sm:$0xff]
    %v2221 = vld [vmem:[#allocation8 + $0x18] sm:$0xff]
    %v2222 = vld [vmem:[#allocation8 + $0x20] sm:$0xff]
    %v2223 = vld [vmem:[#allocation8 + $0x28] sm:$0xff]
    %v2224 = vld [vmem:[#allocation8 + $0x30] sm:$0xff]
    %v2225 = vld [vmem:[#allocation8 + $0x38] sm:$0xff]
    %v2226 = vld [vmem:[#allocation8 + $0x40] sm:$0xff]
    %v2227 = vld [vmem:[#allocation8 + $0x48] sm:$0xff]
    %v2228 = vld [vmem:[#allocation8 + $0x50] sm:$0xff]
    %v2229 = vld [vmem:[#allocation8 + $0x58] sm:$0xff]
    %v2230 = vld [vmem:[#allocation8 + $0x60] sm:$0xff]
    %v2231 = vld [vmem:[#allocation8 + $0x68] sm:$0xff]
    %v2232 = vld [vmem:[#allocation8 + $0x70] sm:$0xff]
    %v2233 = vld [vmem:[#allocation8 + $0x78] sm:$0xff]
    %v2234 = vld [vmem:[#allocation8 + $0x80] sm:$0xff]
    %v2235 = vld [vmem:[#allocation8 + $0x88] sm:$0xff]
    %v2236 = vld [vmem:[#allocation8 + $0x90] sm:$0xff]
    %v2237 = vld [vmem:[#allocation8 + $0x98] sm:$0xff]
    %v2238 = vld [vmem:[#allocation8 + $0xa0] sm:$0xff]
    %v2239 = vld [vmem:[#allocation8 + $0xa8] sm:$0xff]
    %v2240 = vld [vmem:[#allocation8 + $0xb0] sm:$0xff]
    %v2241 = vld [vmem:[#allocation8 + $0xb8] sm:$0xff]
    %v2242 = vld [vmem:[#allocation8 + $0xc0] sm:$0xff]
    %v2243 = vld [vmem:[#allocation8 + $0xc8] sm:$0xff]
    %v2244 = vld [vmem:[#allocation8 + $0xd0] sm:$0xff]
    %v2245 = vld [vmem:[#allocation8 + $0xd8] sm:$0xff]
    %v2246 = vld [vmem:[#allocation8 + $0xe0] sm:$0xff]
    %v2247 = vld [vmem:[#allocation8 + $0xe8] sm:$0xff]
    %v2248 = vld [vmem:[#allocation8 + $0xf0] sm:$0xff]
    %v2249 = vld [vmem:[#allocation8 + $0xf8] sm:$0xff]
    %v2250 = vld [vmem:[#allocation8 + $0x100] sm:$0xff]
    %v2251 = vld [vmem:[#allocation8 + $0x108] sm:$0xff]
    %v2252 = vld [vmem:[#allocation8 + $0x110] sm:$0xff]
    %v2253 = vld [vmem:[#allocation8 + $0x118] sm:$0xff]
    %v2254 = vld [vmem:[#allocation8 + $0x120] sm:$0xff]
    %v2255 = vld [vmem:[#allocation8 + $0x128] sm:$0xff]
    %v2256 = vld [vmem:[#allocation8 + $0x130] sm:$0xff]
    %v2257 = vld [vmem:[#allocation8 + $0x138] sm:$0xff]
    %v2258 = vld [vmem:[#allocation8 + $0x140] sm:$0xff]
    %v2259 = vld [vmem:[#allocation8 + $0x148] sm:$0xff]
    %v2260 = vld [vmem:[#allocation8 + $0x150] sm:$0xff]
    %v2261 = vld [vmem:[#allocation8 + $0x158] sm:$0xff]
    %v2262 = vld [vmem:[#allocation8 + $0x160] sm:$0xff]
    %v2263 = vld [vmem:[#allocation8 + $0x168] sm:$0xff]
    %v2264 = vld [vmem:[#allocation8 + $0x170] sm:$0xff]
    %v2265 = vld [vmem:[#allocation8 + $0x178] sm:$0xff]
    %v2266 = vld [vmem:[#allocation8 + $0x180] sm:$0xff]
    %v2267 = vld [vmem:[#allocation8 + $0x188] sm:$0xff]
    %v2268 = vld [vmem:[#allocation8 + $0x190] sm:$0xff]
    %v2269 = vld [vmem:[#allocation8 + $0x198] sm:$0xff]
    %v2270 = vld [vmem:[#allocation8 + $0x1a0] sm:$0xff]
    %v2271 = vld [vmem:[#allocation8 + $0x1a8] sm:$0xff]
    %v2272 = vld [vmem:[#allocation8 + $0x1b0] sm:$0xff]
    %v2273 = vld [vmem:[#allocation8 + $0x1b8] sm:$0xff]
    %v2274 = vld [vmem:[#allocation8 + $0x1c0] sm:$0xff]
    %v2275 = vld [vmem:[#allocation8 + $0x1c8] sm:$0xff]
    %v2276 = vld [vmem:[#allocation8 + $0x1d0] sm:$0xff]
    %v2277 = vld [vmem:[#allocation8 + $0x1d8] sm:$0xff]
    %v2278 = vld [vmem:[#allocation8 + $0x1e0] sm:$0xff]
    %v2279 = vld [vmem:[#allocation8 + $0x1e8] sm:$0xff]
    %v2280 = vld [vmem:[#allocation8 + $0x1f0] sm:$0xff]
    %v2281 = vld [vmem:[#allocation8 + $0x1f8] sm:$0xff]
    %v2282 = vld [vmem:[%s6] sm:$0x3]
    %v2284 = vlaneseq
    %v2285 = vshrl.u32 %v2284, 7
    %v2286 = vsub.s32 0, %v2285
    %v2287 = vrot.slane %v2282, %v2286
    %v2288 = vlaneseq
    %v2289 = vshrl.u32 %v2288, 7
    %v2290 = vsub.s32 1, %v2289
    %v2291 = vrot.slane %v2282, %v2290
    %v2358 = vunpack.c.l.b16 %v2218
    %v2359 = vunpack.c.h.b16 %v2218
    %v2360 = vunpack.c.l.b16 %v2219
    %v2361 = vunpack.c.h.b16 %v2219
    %v2362 = vunpack.c.l.b16 %v2220
    %v2363 = vunpack.c.h.b16 %v2220
    %v2364 = vunpack.c.l.b16 %v2221
    %v2365 = vunpack.c.h.b16 %v2221
    %v2366 = vunpack.c.l.b16 %v2222
    %v2367 = vunpack.c.h.b16 %v2222
    %v2368 = vunpack.c.l.b16 %v2223
    %v2369 = vunpack.c.h.b16 %v2223
    %v2370 = vunpack.c.l.b16 %v2224
    %v2371 = vunpack.c.h.b16 %v2224
    %v2372 = vunpack.c.l.b16 %v2225
    %v2373 = vunpack.c.h.b16 %v2225
    %v2374 = vunpack.c.l.b16 %v2226
    %v2375 = vunpack.c.h.b16 %v2226
    %v2376 = vunpack.c.l.b16 %v2227
    %v2377 = vunpack.c.h.b16 %v2227
    %v2378 = vunpack.c.l.b16 %v2228
    %v2379 = vunpack.c.h.b16 %v2228
    %v2380 = vunpack.c.l.b16 %v2229
    %v2381 = vunpack.c.h.b16 %v2229
    %v2382 = vunpack.c.l.b16 %v2230
    %v2383 = vunpack.c.h.b16 %v2230
    %v2384 = vunpack.c.l.b16 %v2231
    %v2385 = vunpack.c.h.b16 %v2231
    %v2386 = vunpack.c.l.b16 %v2232
    %v2387 = vunpack.c.h.b16 %v2232
    %v2388 = vunpack.c.l.b16 %v2233
    %v2389 = vunpack.c.h.b16 %v2233
    %v2390 = vunpack.c.l.b16 %v2234
    %v2391 = vunpack.c.h.b16 %v2234
    %v2392 = vunpack.c.l.b16 %v2235
    %v2393 = vunpack.c.h.b16 %v2235
    %v2394 = vunpack.c.l.b16 %v2236
    %v2395 = vunpack.c.h.b16 %v2236
    %v2396 = vunpack.c.l.b16 %v2237
    %v2397 = vunpack.c.h.b16 %v2237
    %v2398 = vunpack.c.l.b16 %v2238
    %v2399 = vunpack.c.h.b16 %v2238
    %v2400 = vunpack.c.l.b16 %v2239
    %v2401 = vunpack.c.h.b16 %v2239
    %v2402 = vunpack.c.l.b16 %v2240
    %v2403 = vunpack.c.h.b16 %v2240
    %v2404 = vunpack.c.l.b16 %v2241
    %v2405 = vunpack.c.h.b16 %v2241
    %v2406 = vunpack.c.l.b16 %v2242
    %v2407 = vunpack.c.h.b16 %v2242
    %v2408 = vunpack.c.l.b16 %v2243
    %v2409 = vunpack.c.h.b16 %v2243
    %v2410 = vunpack.c.l.b16 %v2244
    %v2411 = vunpack.c.h.b16 %v2244
    %v2412 = vunpack.c.l.b16 %v2245
    %v2413 = vunpack.c.h.b16 %v2245
    %v2414 = vunpack.c.l.b16 %v2246
    %v2415 = vunpack.c.h.b16 %v2246
    %v2416 = vunpack.c.l.b16 %v2247
    %v2417 = vunpack.c.h.b16 %v2247
    %v2418 = vunpack.c.l.b16 %v2248
    %v2419 = vunpack.c.h.b16 %v2248
    %v2420 = vunpack.c.l.b16 %v2249
    %v2421 = vunpack.c.h.b16 %v2249
    %v2422 = vunpack.c.l.b16 %v2250
    %v2423 = vunpack.c.h.b16 %v2250
    %v2424 = vunpack.c.l.b16 %v2251
    %v2425 = vunpack.c.h.b16 %v2251
    %v2426 = vunpack.c.l.b16 %v2252
    %v2427 = vunpack.c.h.b16 %v2252
    %v2428 = vunpack.c.l.b16 %v2253
    %v2429 = vunpack.c.h.b16 %v2253
    %v2430 = vunpack.c.l.b16 %v2254
    %v2431 = vunpack.c.h.b16 %v2254
    %v2432 = vunpack.c.l.b16 %v2255
    %v2433 = vunpack.c.h.b16 %v2255
    %v2434 = vunpack.c.l.b16 %v2256
    %v2435 = vunpack.c.h.b16 %v2256
    %v2436 = vunpack.c.l.b16 %v2257
    %v2437 = vunpack.c.h.b16 %v2257
    %v2438 = vunpack.c.l.b16 %v2258
    %v2439 = vunpack.c.h.b16 %v2258
    %v2440 = vunpack.c.l.b16 %v2259
    %v2441 = vunpack.c.h.b16 %v2259
    %v2442 = vunpack.c.l.b16 %v2260
    %v2443 = vunpack.c.h.b16 %v2260
    %v2444 = vunpack.c.l.b16 %v2261
    %v2445 = vunpack.c.h.b16 %v2261
    %v2446 = vunpack.c.l.b16 %v2262
    %v2447 = vunpack.c.h.b16 %v2262
    %v2448 = vunpack.c.l.b16 %v2263
    %v2449 = vunpack.c.h.b16 %v2263
    %v2450 = vunpack.c.l.b16 %v2264
    %v2451 = vunpack.c.h.b16 %v2264
    %v2452 = vunpack.c.l.b16 %v2265
    %v2453 = vunpack.c.h.b16 %v2265
    %v2454 = vunpack.c.l.b16 %v2266
    %v2455 = vunpack.c.h.b16 %v2266
    %v2456 = vunpack.c.l.b16 %v2267
    %v2457 = vunpack.c.h.b16 %v2267
    %v2458 = vunpack.c.l.b16 %v2268
    %v2459 = vunpack.c.h.b16 %v2268
    %v2460 = vunpack.c.l.b16 %v2269
    %v2461 = vunpack.c.h.b16 %v2269
    %v2462 = vunpack.c.l.b16 %v2270
    %v2463 = vunpack.c.h.b16 %v2270
    %v2464 = vunpack.c.l.b16 %v2271
    %v2465 = vunpack.c.h.b16 %v2271
    %v2466 = vunpack.c.l.b16 %v2272
    %v2467 = vunpack.c.h.b16 %v2272
    %v2468 = vunpack.c.l.b16 %v2273
    %v2469 = vunpack.c.h.b16 %v2273
    %v2470 = vunpack.c.l.b16 %v2274
    %v2471 = vunpack.c.h.b16 %v2274
    %v2472 = vunpack.c.l.b16 %v2275
    %v2473 = vunpack.c.h.b16 %v2275
    %v2474 = vunpack.c.l.b16 %v2276
    %v2475 = vunpack.c.h.b16 %v2276
    %v2476 = vunpack.c.l.b16 %v2277
    %v2477 = vunpack.c.h.b16 %v2277
    %v2478 = vunpack.c.l.b16 %v2278
    %v2479 = vunpack.c.h.b16 %v2278
    %v2480 = vunpack.c.l.b16 %v2279
    %v2481 = vunpack.c.h.b16 %v2279
    %v2482 = vunpack.c.l.b16 %v2280
    %v2483 = vunpack.c.h.b16 %v2280
    %v2484 = vunpack.c.l.b16 %v2281
    %v2485 = vunpack.c.h.b16 %v2281
    %v2486 = vpack.c.b16 %v2360, %v2358
    %v2487 = vpack.c.b16 %v2361, %v2359
    %v2488 = vpack.c.b16 %v2364, %v2362
    %v2489 = vpack.c.b16 %v2365, %v2363
    %v2490 = vpack.c.b16 %v2368, %v2366
    %v2491 = vpack.c.b16 %v2369, %v2367
    %v2492 = vpack.c.b16 %v2372, %v2370
    %v2493 = vpack.c.b16 %v2373, %v2371
    %v2494 = vpack.c.b16 %v2376, %v2374
    %v2495 = vpack.c.b16 %v2377, %v2375
    %v2496 = vpack.c.b16 %v2380, %v2378
    %v2497 = vpack.c.b16 %v2381, %v2379
    %v2498 = vpack.c.b16 %v2384, %v2382
    %v2499 = vpack.c.b16 %v2385, %v2383
    %v2500 = vpack.c.b16 %v2388, %v2386
    %v2501 = vpack.c.b16 %v2389, %v2387
    %v2502 = vpack.c.b16 %v2392, %v2390
    %v2503 = vpack.c.b16 %v2393, %v2391
    %v2504 = vpack.c.b16 %v2396, %v2394
    %v2505 = vpack.c.b16 %v2397, %v2395
    %v2506 = vpack.c.b16 %v2400, %v2398
    %v2507 = vpack.c.b16 %v2401, %v2399
    %v2508 = vpack.c.b16 %v2404, %v2402
    %v2509 = vpack.c.b16 %v2405, %v2403
    %v2510 = vpack.c.b16 %v2408, %v2406
    %v2511 = vpack.c.b16 %v2409, %v2407
    %v2512 = vpack.c.b16 %v2412, %v2410
    %v2513 = vpack.c.b16 %v2413, %v2411
    %v2514 = vpack.c.b16 %v2416, %v2414
    %v2515 = vpack.c.b16 %v2417, %v2415
    %v2516 = vpack.c.b16 %v2420, %v2418
    %v2517 = vpack.c.b16 %v2421, %v2419
    %v2518 = vpack.c.b16 %v2424, %v2422
    %v2519 = vpack.c.b16 %v2425, %v2423
    %v2520 = vpack.c.b16 %v2428, %v2426
    %v2521 = vpack.c.b16 %v2429, %v2427
    %v2522 = vpack.c.b16 %v2432, %v2430
    %v2523 = vpack.c.b16 %v2433, %v2431
    %v2524 = vpack.c.b16 %v2436, %v2434
    %v2525 = vpack.c.b16 %v2437, %v2435
    %v2526 = vpack.c.b16 %v2440, %v2438
    %v2527 = vpack.c.b16 %v2441, %v2439
    %v2528 = vpack.c.b16 %v2444, %v2442
    %v2529 = vpack.c.b16 %v2445, %v2443
    %v2530 = vpack.c.b16 %v2448, %v2446
    %v2531 = vpack.c.b16 %v2449, %v2447
    %v2532 = vpack.c.b16 %v2452, %v2450
    %v2533 = vpack.c.b16 %v2453, %v2451
    %v2534 = vpack.c.b16 %v2456, %v2454
    %v2535 = vpack.c.b16 %v2457, %v2455
    %v2536 = vpack.c.b16 %v2460, %v2458
    %v2537 = vpack.c.b16 %v2461, %v2459
    %v2538 = vpack.c.b16 %v2464, %v2462
    %v2539 = vpack.c.b16 %v2465, %v2463
    %v2540 = vpack.c.b16 %v2468, %v2466
    %v2541 = vpack.c.b16 %v2469, %v2467
    %v2542 = vpack.c.b16 %v2472, %v2470
    %v2543 = vpack.c.b16 %v2473, %v2471
    %v2544 = vpack.c.b16 %v2476, %v2474
    %v2545 = vpack.c.b16 %v2477, %v2475
    %v2546 = vpack.c.b16 %v2480, %v2478
    %v2547 = vpack.c.b16 %v2481, %v2479
    %v2548 = vpack.c.b16 %v2484, %v2482
    %v2549 = vpack.c.b16 %v2485, %v2483
    %2614 = vmatprep.subr.bf16.mxu0 %v2487
    %2615 = vmatpush1.bf16.msra.mxu0 %v2486
    %2616 = vmatprep.subr.bf16.mxu0 %v2489
    %2617 = vmatpush1.bf16.msra.mxu0 %v2488
    %2618 = vmatprep.subr.bf16.mxu0 %v2491
    %2619 = vmatpush1.bf16.msra.mxu0 %v2490
    %2620 = vmatprep.subr.bf16.mxu0 %v2493
    %2621 = vmatpush1.bf16.msra.mxu0 %v2492
    %2622 = vmatprep.subr.bf16.mxu0 %v2495
    %2623 = vmatpush1.bf16.msra.mxu0 %v2494
    %2624 = vmatprep.subr.bf16.mxu0 %v2497
    %2625 = vmatpush1.bf16.msra.mxu0 %v2496
    %2626 = vmatprep.subr.bf16.mxu0 %v2499
    %2627 = vmatpush1.bf16.msra.mxu0 %v2498
    %2628 = vmatprep.subr.bf16.mxu0 %v2501
    %2629 = vmatpush1.bf16.msra.mxu0 %v2500
    %2630 = vmatprep.subr.bf16.mxu0 %v2503
    %2631 = vmatpush1.bf16.msra.mxu0 %v2502
    %2632 = vmatprep.subr.bf16.mxu0 %v2505
    %2633 = vmatpush1.bf16.msra.mxu0 %v2504
    %2634 = vmatprep.subr.bf16.mxu0 %v2507
    %2635 = vmatpush1.bf16.msra.mxu0 %v2506
    %2636 = vmatprep.subr.bf16.mxu0 %v2509
    %2637 = vmatpush1.bf16.msra.mxu0 %v2508
    %2638 = vmatprep.subr.bf16.mxu0 %v2511
    %2639 = vmatpush1.bf16.msra.mxu0 %v2510
    %2640 = vmatprep.subr.bf16.mxu0 %v2513
    %2641 = vmatpush1.bf16.msra.mxu0 %v2512
    %2642 = vmatprep.subr.bf16.mxu0 %v2515
    %2643 = vmatpush1.bf16.msra.mxu0 %v2514
    %2644 = vmatprep.subr.bf16.mxu0 %v2517
    %2645 = vmatpush1.bf16.msra.mxu0 %v2516
    %2646 = vmatprep.mubr.bf16.mxu0 %v2215
    %2647 = vmatmul.mubr.bf16.gmra.mrb[0].mxu0 %v2214
    %v2648 = vpop.f32.mrb[0].mxu0
    %v2649 = vadd.f32 %v2287, %v2648
    %v2650 = vpop.f32.mrb[0].mxu0
    %v2651 = vadd.f32 %v2291, %v2650
    %v2652 = vpop.f32.mrb[0].mxu0
    %v2653 = vpop.f32.mrb[0].mxu0
    %2654 = vdwg.mxu0
    %2655 = vmatprep.subr.bf16.mxu0 %v2519
    %2656 = vmatpush1.bf16.msra.mxu0 %v2518
    %2657 = vmatprep.subr.bf16.mxu0 %v2521
    %2658 = vmatpush1.bf16.msra.mxu0 %v2520
    %2659 = vmatprep.subr.bf16.mxu0 %v2523
    %2660 = vmatpush1.bf16.msra.mxu0 %v2522
    %2661 = vmatprep.subr.bf16.mxu0 %v2525
    %2662 = vmatpush1.bf16.msra.mxu0 %v2524
    %2663 = vmatprep.subr.bf16.mxu0 %v2527
    %2664 = vmatpush1.bf16.msra.mxu0 %v2526
    %2665 = vmatprep.subr.bf16.mxu0 %v2529
    %2666 = vmatpush1.bf16.msra.mxu0 %v2528
    %2667 = vmatprep.subr.bf16.mxu0 %v2531
    %2668 = vmatpush1.bf16.msra.mxu0 %v2530
    %2669 = vmatprep.subr.bf16.mxu0 %v2533
    %2670 = vmatpush1.bf16.msra.mxu0 %v2532
    %2671 = vmatprep.subr.bf16.mxu0 %v2535
    %2672 = vmatpush1.bf16.msra.mxu0 %v2534
    %2673 = vmatprep.subr.bf16.mxu0 %v2537
    %2674 = vmatpush1.bf16.msra.mxu0 %v2536
    %2675 = vmatprep.subr.bf16.mxu0 %v2539
    %2676 = vmatpush1.bf16.msra.mxu0 %v2538
    %2677 = vmatprep.subr.bf16.mxu0 %v2541
    %2678 = vmatpush1.bf16.msra.mxu0 %v2540
    %2679 = vmatprep.subr.bf16.mxu0 %v2543
    %2680 = vmatpush1.bf16.msra.mxu0 %v2542
    %2681 = vmatprep.subr.bf16.mxu0 %v2545
    %2682 = vmatpush1.bf16.msra.mxu0 %v2544
    %2683 = vmatprep.subr.bf16.mxu0 %v2547
    %2684 = vmatpush1.bf16.msra.mxu0 %v2546
    %2685 = vmatprep.subr.bf16.mxu0 %v2549
    %2686 = vmatpush1.bf16.msra.mxu0 %v2548
    %2687 = vmatprep.mubr.bf16.mxu0 %v2217
    %2688 = vmatmul.mubr.bf16.gmra.mrb[0].mxu0 %v2216
    %v2689 = vpop.f32.mrb[0].mxu0
    %v2690 = vadd.f32 %v2649, %v2689
    %v2691 = vpop.f32.mrb[0].mxu0
    %v2692 = vadd.f32 %v2651, %v2691
    %v2693 = vpop.f32.mrb[0].mxu0
    %v2694 = vpop.f32.mrb[0].mxu0
    %2695 = vdwg.mxu0
    %s2696 = sld [smem:[#allocation5]]
    %v2697 = vstv %s2696
    %v2698 = vmul.f32 %v2697, %v135
    %v2699 = vmul.f32 %v2697, %v136
    %s2700 = sld [smem:[#allocation5 + $0x1]]
    %v2701 = vstv %s2700
    %v2702 = vmul.f32 %v2701, %v191
    %v2703 = vmul.f32 %v2701, %v192
    %v2704 = vadd.f32 %v2698, %v2702
    %v2705 = vadd.f32 %v2699, %v2703
    %s2706 = sld [smem:[#allocation5 + $0x2]]
    %v2707 = vstv %s2706
    %v2708 = vmul.f32 %v2707, %v247
    %v2709 = vmul.f32 %v2707, %v248
    %v2710 = vadd.f32 %v2704, %v2708
    %v2711 = vadd.f32 %v2705, %v2709
    %s2712 = sld [smem:[#allocation5 + $0x3]]
    %v2713 = vstv %s2712
    %v2714 = vmul.f32 %v2713, %v303
    %v2715 = vmul.f32 %v2713, %v304
    %v2716 = vadd.f32 %v2710, %v2714
    %v2717 = vadd.f32 %v2711, %v2715
    %s2718 = sld [smem:[#allocation5 + $0xf]]
    %v2719 = vstv %s2718
    %v2720 = vadd.f32 %v2716, %v2719
    %v2721 = vadd.f32 %v2717, %v2719
    %s2722 = sld [smem:[#allocation5 + $0xc]]
    %v2723 = vstv %s2722
    %v2724 = vmul.f32 %v2723, %v2690
    %v2725 = vmul.f32 %v2723, %v2692
    %v2726 = vadd.f32 %v2720, %v2724
    %v2727 = vadd.f32 %v2721, %v2725
    %v2728 = vsub.f32 0.0, %v2726
    %v2729 = vsub.f32 0.0, %v2727
    %v2730 = vmul.f32 %v2728, 1.442695
    %v2731 = vpow.pop %v2730
    %v2732 = vmul.f32 %v2729, 1.442695
    %v2733 = vpow.pop %v2732
    %v2734 = vadd.f32 %v2731, 1.0
    %v2735 = vadd.f32 %v2733, 1.0
    %v2736 = vrcp.pop %v2734
    %v2737 = vrcp.pop %v2735
    %s2738 = sld [smem:[#allocation5 + $0x4]]
    %v2739 = vstv %s2738
    %v2740 = vmul.f32 %v2739, %v135
    %v2741 = vmul.f32 %v2739, %v136
    %s2742 = sld [smem:[#allocation5 + $0x5]]
    %v2743 = vstv %s2742
    %v2744 = vmul.f32 %v2743, %v191
    %v2745 = vmul.f32 %v2743, %v192
    %v2746 = vadd.f32 %v2740, %v2744
    %v2747 = vadd.f32 %v2741, %v2745
    %s2748 = sld [smem:[#allocation5 + $0x6]]
    %v2749 = vstv %s2748
    %v2750 = vmul.f32 %v2749, %v247
    %v2751 = vmul.f32 %v2749, %v248
    %v2752 = vadd.f32 %v2746, %v2750
    %v2753 = vadd.f32 %v2747, %v2751
    %s2754 = sld [smem:[#allocation5 + $0x7]]
    %v2755 = vstv %s2754
    %v2756 = vmul.f32 %v2755, %v303
    %v2757 = vmul.f32 %v2755, %v304
    %v2758 = vadd.f32 %v2752, %v2756
    %v2759 = vadd.f32 %v2753, %v2757
    %s2760 = sld [smem:[#allocation5 + $0x10]]
    %v2761 = vstv %s2760
    %v2762 = vadd.f32 %v2758, %v2761
    %v2763 = vadd.f32 %v2759, %v2761
    %s2764 = sld [smem:[#allocation5 + $0xd]]
    %v2765 = vstv %s2764
    %v2766 = vmul.f32 %v2765, %v2690
    %v2767 = vmul.f32 %v2765, %v2692
    %v2768 = vadd.f32 %v2762, %v2766
    %v2769 = vadd.f32 %v2763, %v2767
    %v2770 = vsub.f32 0.0, %v2768
    %v2771 = vsub.f32 0.0, %v2769
    %v2772 = vmul.f32 %v2770, 1.442695
    %v2773 = vpow.pop %v2772
    %v2774 = vmul.f32 %v2771, 1.442695
    %v2775 = vpow.pop %v2774
    %v2776 = vadd.f32 %v2773, 1.0
    %v2777 = vadd.f32 %v2775, 1.0
    %v2778 = vrcp.pop %v2776
    %v2779 = vrcp.pop %v2777
    %s2780 = sld [smem:[#allocation5 + $0x8]]
    %v2781 = vstv %s2780
    %v2782 = vmul.f32 %v2781, %v135
    %v2783 = vmul.f32 %v2781, %v136
    %s2784 = sld [smem:[#allocation5 + $0x9]]
    %v2785 = vstv %s2784
    %v2786 = vmul.f32 %v2785, %v191
    %v2787 = vmul.f32 %v2785, %v192
    %v2788 = vadd.f32 %v2782, %v2786
    %v2789 = vadd.f32 %v2783, %v2787
    %s2790 = sld [smem:[#allocation5 + $0xa]]
    %v2791 = vstv %s2790
    %v2792 = vmul.f32 %v2791, %v247
    %v2793 = vmul.f32 %v2791, %v248
    %v2794 = vadd.f32 %v2788, %v2792
    %v2795 = vadd.f32 %v2789, %v2793
    %s2796 = sld [smem:[#allocation5 + $0xb]]
    %v2797 = vstv %s2796
    %v2798 = vmul.f32 %v2797, %v303
    %v2799 = vmul.f32 %v2797, %v304
    %v2800 = vadd.f32 %v2794, %v2798
    %v2801 = vadd.f32 %v2795, %v2799
    %s2802 = sld [smem:[#allocation5 + $0x11]]
    %v2803 = vstv %s2802
    %v2804 = vadd.f32 %v2800, %v2803
    %v2805 = vadd.f32 %v2801, %v2803
    %s2806 = sld [smem:[#allocation5 + $0xe]]
    %v2807 = vstv %s2806
    %v2808 = vmul.f32 %v2807, %v2690
    %v2809 = vmul.f32 %v2807, %v2692
    %s2810 = sld [smem:[#allocation5 + $0x12]]
    %v2811 = vstv %s2810
    %v2812 = vadd.f32 %v2808, %v2811
    %v2813 = vadd.f32 %v2809, %v2811
    %v2814 = vmul.f32 %v2736, %v2812
    %v2815 = vmul.f32 %v2737, %v2813
    %v2816 = vadd.f32 %v2804, %v2814
    %v2817 = vadd.f32 %v2805, %v2815
    %v2818 = vtanh.pop %v2816
    %v2819 = vtanh.pop %v2817
    %v2820 = vsub.f32 1.0, %v2778
    %v2821 = vsub.f32 1.0, %v2779
    %v2822 = vmul.f32 %v2820, %v2818
    %v2823 = vmul.f32 %v2821, %v2819
    %v2824 = vmul.f32 %v2778, %v2690
    %v2825 = vmul.f32 %v2779, %v2692
    %v2826 = vadd.f32 %v2822, %v2824
    %v2827 = vadd.f32 %v2823, %v2825
    %2828 = vst [vmem:[%s7] sm:$0xff] %v2826
    %2829 = vst [vmem:[%s7 + $0x8] sm:$0xff] %v2827
    // Predicated region
    $region46: #{gru_simp_forward_batched.1} parent=1 // pred_check
      _
    $region47: #{gru_simp_forward_batched.1} parent=1 // pred_check_branch
      %2831 = sbr.rel (0) target = $region49
    $region48: #{gru_simp_forward_batched.1} parent=1 // pred_region
      _
    $region49: #{gru_simp_forward_batched.1} parent=1 // pred_fallthru
      _
    // Predicated region
    $region50: #{gru_simp_forward_batched.1} parent=1 // pred_check
      _
    $region51: #{gru_simp_forward_batched.1} parent=1 // pred_check_branch
      %2833 = sbr.rel (0) target = $region53
    $region52: #{gru_simp_forward_batched.1} parent=1 // pred_region
      _
    $region53: #{gru_simp_forward_batched.1} parent=1 // pred_fallthru
      _
    %2834 = vsyncpa [#allocation3], 1
    %2835 = vsyncpa [#allocation9], 1
    %2836 = vsyncpa [#allocation4], 1
    %2837 = vsyncpa [#allocation6], 1

</llo_original>
